<compile_context>
chip_gen: v7x
topology: tpu7x:2x2x1
jax: 0.10.0
libtpu: 0.0.40
codegen_flags: <defaults>
</compile_context>

<pallas_src>
import functools

import jax
import jax.numpy as jnp
from jax import lax
from jax.experimental import pallas as pl
from jax.experimental.pallas import tpu as pltpu


def _prenorm_attn_kernel(x_ref, g_ref, b_ref, wqkv_ref, wo_ref, bout_ref,
                         o_ref, *, heads, dim_head, eps):
    # x_ref:    (1, n, dim)              one batch element
    # g_ref:    (1, dim)                 LayerNorm gamma
    # b_ref:    (1, dim)                 LayerNorm beta
    # wqkv_ref: (3*inner_dim, dim)       packed QKV weight (PyTorch row layout,
    #                                    softmax scale pre-folded into Q rows)
    # wo_ref:   (heads, dim_head, dim)   head-major output projection
    # bout_ref: (1, dim)                 output projection bias
    # o_ref:    (1, n, dim)
    n = x_ref.shape[1]
    cdt = x_ref.dtype                      # model dtype -> MXU operand dtype

    x = x_ref[0].astype(jnp.float32)                       # (n, dim)

    # ---- LayerNorm over the channel dim (statistics in f32) ---------------
    mean = jnp.mean(x, axis=-1, keepdims=True)
    xc = x - mean
    var = jnp.mean(xc * xc, axis=-1, keepdims=True)
    xn = xc * lax.rsqrt(var + eps)
    xn = xn * g_ref[...].astype(jnp.float32) + b_ref[...].astype(jnp.float32)
    xn = xn.astype(cdt)                                    # MXU operand dtype

    # ---- packed QKV projection: one contraction over `dim` ----------------
    # qkvT[r, i] = sum_c Wqkv[r, c] * xn[i, c]   -> (3*inner_dim, n)
    qkvT = lax.dot_general(wqkv_ref[...], xn, (((1,), (1,)), ((), ())),
                           preferred_element_type=jnp.float32)
    # Free reshape (sublane split; dim_head % 8 == 0) + static leading index.
    qkvT = qkvT.astype(cdt).reshape(3, heads, dim_head, n)
    qT, kT, vT = qkvT[0], qkvT[1], qkvT[2]                 # (heads, dim_head, n)

    # ---- batched attention over the head axis -----------------------------
    q = jnp.transpose(qT, (0, 2, 1))                       # (heads, n, dim_head)
    # softmax scale already folded into W_q at pack time -> no multiply here.
    dots = lax.dot_general(q, kT, (((2,), (1,)), ((0,), (0,))),
                           preferred_element_type=jnp.float32)   # (heads, n, n)

    dots = dots - jnp.max(dots, axis=-1, keepdims=True)
    e = jnp.exp(dots)
    attn = e * pl.reciprocal(jnp.sum(e, axis=-1, keepdims=True), approx=True)
    attn = attn.astype(cdt)

    # out[h, i, d] = sum_j attn[h, i, j] * v[h, j, d]   (vT stored (h, d, j))
    out = lax.dot_general(attn, vT, (((2,), (2,)), ((0,), (0,))),
                          preferred_element_type=jnp.float32)    # (heads, n, dim_head)
    out = out.astype(cdt)

    # ---- output projection folded per head (no concat), sum over heads ----
    proj_h = lax.dot_general(out, wo_ref[...], (((2,), (1,)), ((0,), (0,))),
                             preferred_element_type=jnp.float32) # (heads, n, dim)
    proj = jnp.sum(proj_h, axis=0) + bout_ref[...].astype(jnp.float32)

    o_ref[0] = proj.astype(o_ref.dtype)                    # single lane-dense store


def pack_params(w_qkv, w_out, *, heads, dim_head):
    """Pre-pack PyTorch-layout weights ONCE (parameter-load time, not per call).
      w_qkv: (3*inner_dim, dim) from nn.Linear(dim, 3*inner_dim, bias=False)
             -> same row layout, softmax scale folded into the Q rows.
      w_out: (dim, inner_dim)   from nn.Linear(inner_dim, dim)
             -> head-major (heads, dim_head, dim).
    """
    w_qkv = jnp.asarray(w_qkv)
    w_out = jnp.asarray(w_out)
    inner_dim = heads * dim_head
    dim = w_out.shape[0]
    scale = dim_head ** (-0.5)
    wqkv_packed = jnp.concatenate(
        [w_qkv[:inner_dim] * scale, w_qkv[inner_dim:]], axis=0)   # (3*inner, dim)
    wo_packed = w_out.T.reshape(heads, dim_head, dim)             # (h, d, dim)
    return wqkv_packed, wo_packed


def prenorm_attention_forward(x, gamma, beta, wqkv_packed, wo_packed, b_out,
                              *, heads, dim_head, eps=1e-5):
    """x: (b, n, dim). Weights pre-packed via pack_params."""
    b, n, dim = x.shape
    inner_dim = heads * dim_head
    assert wqkv_packed.shape == (3 * inner_dim, dim)
    assert wo_packed.shape == (heads, dim_head, dim)

    kernel = functools.partial(_prenorm_attn_kernel, heads=heads,
                               dim_head=dim_head, eps=eps)

    # VMEM budgeting: inputs/outputs are double-buffered by the pipeline;
    # raise the scoped limit only when the working set needs it.
    bpe = jnp.dtype(x.dtype).itemsize
    wbpe = jnp.dtype(wqkv_packed.dtype).itemsize
    weight_bytes = (wqkv_packed.size + wo_packed.size) * wbpe
    io_bytes = 2 * n * dim * bpe
    interm_bytes = 4 * (3 * inner_dim * n + 2 * heads * n * n
                        + 2 * heads * n * dim_head + heads * n * dim + 2 * n * dim)
    need = 2 * (weight_bytes + io_bytes) + interm_bytes + (2 << 20)
    cp_kwargs = dict(dimension_semantics=("parallel",))  # batch across TCs (v7x)
    if need > 16 * 1024 * 1024:
        cp_kwargs["vmem_limit_bytes"] = int(min(need, 64 * 1024 * 1024))

    return pl.pallas_call(
        kernel,
        out_shape=jax.ShapeDtypeStruct((b, n, dim), x.dtype),
        grid_spec=pltpu.PrefetchScalarGridSpec(
            num_scalar_prefetch=0,
            grid=(b,),
            in_specs=[
                pl.BlockSpec((1, n, dim), lambda i: (i, 0, 0)),             # x
                pl.BlockSpec((1, dim), lambda i: (0, 0)),                   # gamma
                pl.BlockSpec((1, dim), lambda i: (0, 0)),                   # beta
                pl.BlockSpec((3 * inner_dim, dim), lambda i: (0, 0)),       # W_qkv
                pl.BlockSpec((heads, dim_head, dim), lambda i: (0, 0, 0)),  # W_out
                pl.BlockSpec((1, dim), lambda i: (0, 0)),                   # b_out
            ],
            out_specs=pl.BlockSpec((1, n, dim), lambda i: (i, 0, 0)),
        ),
        compiler_params=pltpu.CompilerParams(**cp_kwargs),
    )(x, gamma.reshape(1, dim), beta.reshape(1, dim),
      wqkv_packed, wo_packed, b_out.reshape(1, dim))


def reference_forward(x, gamma, beta, w_qkv, w_out, b_out,
                      *, heads, dim_head, eps=1e-5):
    """Pure-JAX reference matching PyTorch PreNorm(dim, Attention(...))."""
    b, n, dim = x.shape
    inner_dim = heads * dim_head
    scale = dim_head ** (-0.5)

    mean = jnp.mean(x, axis=-1, keepdims=True)
    var = jnp.mean((x - mean) ** 2, axis=-1, keepdims=True)
    xn = (x - mean) / jnp.sqrt(var + eps) * gamma + beta

    qkv = xn @ w_qkv.T                                     # (b, n, 3*inner_dim)
    q, k, v = jnp.split(qkv, 3, axis=-1)

    def rearr(t):
        return t.reshape(b, n, heads, dim_head).transpose(0, 2, 1, 3)

    q, k, v = rearr(q), rearr(k), rearr(v)
    dots = jnp.einsum('bhid,bhjd->bhij', q, k) * scale
    attn = jax.nn.softmax(dots, axis=-1)
    out = jnp.einsum('bhij,bhjd->bhid', attn, v)
    out = out.transpose(0, 2, 1, 3).reshape(b, n, inner_dim)
    return out @ w_out.T + b_out


if __name__ == "__main__":
    batch, seq, dim = 2, 8, 32
    heads, dim_head = 4, 16
    inner_dim = heads * dim_head

    key = jax.random.PRNGKey(0)
    kx, kqkv, kwo, kbo, kg, kb = jax.random.split(key, 6)

    x = jax.random.normal(kx, (batch, seq, dim), dtype=jnp.float32)
    # nn.Linear(dim, inner_dim*3, bias=False).weight -> (3*inner_dim, dim)
    w_qkv = jax.random.normal(kqkv, (3 * inner_dim, dim), dtype=jnp.float32) * 0.05
    # nn.Linear(inner_dim, dim).weight -> (dim, inner_dim), bias -> (dim,)
    w_out = jax.random.normal(kwo, (dim, inner_dim), dtype=jnp.float32) * 0.05
    b_out = jax.random.normal(kbo, (dim,), dtype=jnp.float32) * 0.05
    # nn.LayerNorm(dim) affine params (perturbed to exercise the path)
    gamma = 1.0 + 0.1 * jax.random.normal(kg, (dim,), dtype=jnp.float32)
    beta = 0.1 * jax.random.normal(kb, (dim,), dtype=jnp.float32)

    # Pack weights once (parameter-load time), not per forward call.
    wqkv_packed, wo_packed = pack_params(w_qkv, w_out, heads=heads,
                                         dim_head=dim_head)

    y = prenorm_attention_forward(x, gamma, beta, wqkv_packed, wo_packed,
                                  b_out, heads=heads, dim_head=dim_head)
    y = jax.block_until_ready(y)

    y_ref = reference_forward(x, gamma, beta, w_qkv, w_out, b_out,
                              heads=heads, dim_head=dim_head)

    assert y.shape == (batch, seq, dim)
    # Slightly looser tolerance because of pl.reciprocal(approx=True) in softmax.
    assert jnp.allclose(y, y_ref, atol=2e-3, rtol=2e-3), "mismatch vs reference"

    print("KERNEL_OK")
</pallas_src>

<mosaic_0001>
module attributes {stable_mosaic.version = 11 : i64} {
  func.func @_prenorm_attn_kernel(%arg0: i32, %arg1: memref<1x8x32xf32, #tpu.memory_space<vmem>>, %arg2: memref<1x32xf32, #tpu.memory_space<vmem>>, %arg3: memref<1x32xf32, #tpu.memory_space<vmem>>, %arg4: memref<192x32xf32, #tpu.memory_space<vmem>>, %arg5: memref<4x16x32xf32, #tpu.memory_space<vmem>>, %arg6: memref<1x32xf32, #tpu.memory_space<vmem>>, %arg7: memref<1x8x32xf32, #tpu.memory_space<vmem>>) attributes {dimension_semantics = [#tpu.dimension_semantics<parallel>], iteration_bounds = array<i64: 2>, scalar_prefetch = 0 : i64, scratch_operands = 0 : i64, tpu.core_type = #tpu.core_type<tc>, window_params = [{transform_indices = @transform_0, window_bounds = array<i64: 1, 8, 32>}, {pipeline_mode = #tpu.pipeline_mode<synchronous>, transform_indices = @transform_1, window_bounds = array<i64: 1, 32>}, {pipeline_mode = #tpu.pipeline_mode<synchronous>, transform_indices = @transform_2, window_bounds = array<i64: 1, 32>}, {pipeline_mode = #tpu.pipeline_mode<synchronous>, transform_indices = @transform_3, window_bounds = array<i64: 192, 32>}, {pipeline_mode = #tpu.pipeline_mode<synchronous>, transform_indices = @transform_4, window_bounds = array<i64: 4, 16, 32>}, {pipeline_mode = #tpu.pipeline_mode<synchronous>, transform_indices = @transform_5, window_bounds = array<i64: 1, 32>}, {transform_indices = @transform_6, window_bounds = array<i64: 1, 8, 32>}]} {
    %c0 = arith.constant 0 : index
    %c0_0 = arith.constant 0 : index
    %c0_1 = arith.constant 0 : index
    %0 = vector.load %arg1[%c0, %c0_0, %c0_1] : memref<1x8x32xf32, #tpu.memory_space<vmem>>, vector<1x8x32xf32>
    %1 = vector.shape_cast %0 : vector<1x8x32xf32> to vector<8x32xf32>
    %cst = arith.constant dense<0.000000e+00> : vector<8xf32>
    %2 = vector.multi_reduction <add>, %1, %cst [1] : vector<8x32xf32> to vector<8xf32>
    %3 = vector.shape_cast %2 : vector<8xf32> to vector<8x1xf32>
    %cst_2 = arith.constant 3.200000e+01 : f32
    %4 = vector.broadcast %cst_2 : f32 to vector<8x1xf32>
    %5 = arith.divf %3, %4 : vector<8x1xf32>
    %6 = vector.broadcast %5 : vector<8x1xf32> to vector<8x32xf32>
    %7 = arith.subf %1, %6 : vector<8x32xf32>
    %8 = arith.mulf %7, %7 : vector<8x32xf32>
    %cst_3 = arith.constant dense<0.000000e+00> : vector<8xf32>
    %9 = vector.multi_reduction <add>, %8, %cst_3 [1] : vector<8x32xf32> to vector<8xf32>
    %10 = vector.shape_cast %9 : vector<8xf32> to vector<8x1xf32>
    %cst_4 = arith.constant 3.200000e+01 : f32
    %11 = vector.broadcast %cst_4 : f32 to vector<8x1xf32>
    %12 = arith.divf %10, %11 : vector<8x1xf32>
    %cst_5 = arith.constant 9.99999974E-6 : f32
    %13 = vector.broadcast %cst_5 : f32 to vector<8x1xf32>
    %14 = arith.addf %12, %13 : vector<8x1xf32>
    %15 = math.rsqrt %14 : vector<8x1xf32>
    %16 = vector.broadcast %15 : vector<8x1xf32> to vector<8x32xf32>
    %17 = arith.mulf %7, %16 : vector<8x32xf32>
    %c0_6 = arith.constant 0 : index
    %c0_7 = arith.constant 0 : index
    %18 = vector.load %arg2[%c0_6, %c0_7] : memref<1x32xf32, #tpu.memory_space<vmem>>, vector<1x32xf32>
    %19 = vector.broadcast %18 : vector<1x32xf32> to vector<8x32xf32>
    %20 = arith.mulf %17, %19 : vector<8x32xf32>
    %c0_8 = arith.constant 0 : index
    %c0_9 = arith.constant 0 : index
    %21 = vector.load %arg3[%c0_8, %c0_9] : memref<1x32xf32, #tpu.memory_space<vmem>>, vector<1x32xf32>
    %22 = vector.broadcast %21 : vector<1x32xf32> to vector<8x32xf32>
    %23 = arith.addf %20, %22 : vector<8x32xf32>
    %c0_10 = arith.constant 0 : index
    %c0_11 = arith.constant 0 : index
    %24 = vector.load %arg4[%c0_10, %c0_11] : memref<192x32xf32, #tpu.memory_space<vmem>>, vector<192x32xf32>
    %cst_12 = arith.constant dense<0.000000e+00> : vector<192x8xf32>
    %25 = tpu.matmul %24, %23, %cst_12 {dimension_numbers = #tpu.dot_dimension_numbers<[1], [1], [0], [0], [0, 0, 1, 0], [], []>} : vector<192x32xf32>, vector<8x32xf32>, vector<192x8xf32> -> vector<192x8xf32>
    %26 = vector.shape_cast %25 : vector<192x8xf32> to vector<3x4x16x8xf32>
    %27 = vector.extract_strided_slice %26 {offsets = [0, 0, 0, 0], sizes = [1, 4, 16, 8], strides = [1, 1, 1, 1]} : vector<3x4x16x8xf32> to vector<1x4x16x8xf32>
    %28 = vector.shape_cast %27 : vector<1x4x16x8xf32> to vector<4x16x8xf32>
    %29 = vector.extract_strided_slice %26 {offsets = [1, 0, 0, 0], sizes = [1, 4, 16, 8], strides = [1, 1, 1, 1]} : vector<3x4x16x8xf32> to vector<1x4x16x8xf32>
    %30 = vector.shape_cast %29 : vector<1x4x16x8xf32> to vector<4x16x8xf32>
    %31 = vector.extract_strided_slice %26 {offsets = [2, 0, 0, 0], sizes = [1, 4, 16, 8], strides = [1, 1, 1, 1]} : vector<3x4x16x8xf32> to vector<1x4x16x8xf32>
    %32 = vector.shape_cast %31 : vector<1x4x16x8xf32> to vector<4x16x8xf32>
    %33 = tpu.transpose %28, [0, 2, 1] : vector<4x16x8xf32> -> vector<4x8x16xf32>
    %cst_13 = arith.constant dense<0.000000e+00> : vector<4x8x8xf32>
    %34 = tpu.matmul %33, %30, %cst_13 {dimension_numbers = #tpu.dot_dimension_numbers<[2], [1], [1], [2], [0, 0, 0, 1, 1, 2], [0], [0]>} : vector<4x8x16xf32>, vector<4x16x8xf32>, vector<4x8x8xf32> -> vector<4x8x8xf32>
    %cst_14 = arith.constant dense<0xFF800000> : vector<4x8xf32>
    %35 = vector.multi_reduction <maximumf>, %34, %cst_14 [2] : vector<4x8x8xf32> to vector<4x8xf32>
    %36 = vector.shape_cast %35 : vector<4x8xf32> to vector<4x8x1xf32>
    %37 = vector.broadcast %36 : vector<4x8x1xf32> to vector<4x8x8xf32>
    %38 = arith.subf %34, %37 : vector<4x8x8xf32>
    %39 = math.exp %38 : vector<4x8x8xf32>
    %cst_15 = arith.constant dense<0.000000e+00> : vector<4x8xf32>
    %40 = vector.multi_reduction <add>, %39, %cst_15 [2] : vector<4x8x8xf32> to vector<4x8xf32>
    %41 = vector.shape_cast %40 : vector<4x8xf32> to vector<4x8x1xf32>
    %42 = tpu.reciprocal %41 {approx = true} : vector<4x8x1xf32> -> vector<4x8x1xf32>
    %43 = vector.broadcast %42 : vector<4x8x1xf32> to vector<4x8x8xf32>
    %44 = arith.mulf %39, %43 : vector<4x8x8xf32>
    %cst_16 = arith.constant dense<0.000000e+00> : vector<4x8x16xf32>
    %45 = tpu.matmul %44, %32, %cst_16 {dimension_numbers = #tpu.dot_dimension_numbers<[2], [2], [1], [1], [0, 0, 0, 1, 1, 1], [0], [0]>} : vector<4x8x8xf32>, vector<4x16x8xf32>, vector<4x8x16xf32> -> vector<4x8x16xf32>
    %c0_17 = arith.constant 0 : index
    %c0_18 = arith.constant 0 : index
    %c0_19 = arith.constant 0 : index
    %46 = vector.load %arg5[%c0_17, %c0_18, %c0_19] : memref<4x16x32xf32, #tpu.memory_space<vmem>>, vector<4x16x32xf32>
    %cst_20 = arith.constant dense<0.000000e+00> : vector<4x8x32xf32>
    %47 = tpu.matmul %45, %46, %cst_20 {dimension_numbers = #tpu.dot_dimension_numbers<[2], [1], [1], [2], [0, 0, 0, 1, 1, 2], [0], [0]>} : vector<4x8x16xf32>, vector<4x16x32xf32>, vector<4x8x32xf32> -> vector<4x8x32xf32>
    %cst_21 = arith.constant dense<0.000000e+00> : vector<8x32xf32>
    %48 = vector.multi_reduction <add>, %47, %cst_21 [0] : vector<4x8x32xf32> to vector<8x32xf32>
    %c0_22 = arith.constant 0 : index
    %c0_23 = arith.constant 0 : index
    %49 = vector.load %arg6[%c0_22, %c0_23] : memref<1x32xf32, #tpu.memory_space<vmem>>, vector<1x32xf32>
    %50 = vector.broadcast %49 : vector<1x32xf32> to vector<8x32xf32>
    %51 = arith.addf %48, %50 : vector<8x32xf32>
    %c0_24 = arith.constant 0 : index
    %c0_25 = arith.constant 0 : index
    %c0_26 = arith.constant 0 : index
    %52 = vector.load %arg7[%c0_24, %c0_25, %c0_26] : memref<1x8x32xf32, #tpu.memory_space<vmem>>, vector<1x8x32xf32>
    %53 = vector.shape_cast %52 : vector<1x8x32xf32> to vector<8x32xf32>
    %54 = vector.shape_cast %51 : vector<8x32xf32> to vector<1x8x32xf32>
    tpu.vector_store %arg7[%c0_24, %c0_25, %c0_26], %54 {strides = array<i32>} : memref<1x8x32xf32, #tpu.memory_space<vmem>>, vector<1x8x32xf32>,
    return
  }
  func.func @transform_0(%arg0: i32) -> (i32, i32, i32) {
    %c0_i32 = arith.constant 0 : i32
    %c0_i32_0 = arith.constant 0 : i32
    %c0_i32_1 = arith.constant 0 : i32
    return %arg0, %c0_i32, %c0_i32_0 : i32, i32, i32
  }
  func.func @transform_1(%arg0: i32) -> (i32, i32) {
    %c0_i32 = arith.constant 0 : i32
    %c0_i32_0 = arith.constant 0 : i32
    %c0_i32_1 = arith.constant 0 : i32
    return %c0_i32, %c0_i32_0 : i32, i32
  }
  func.func @transform_2(%arg0: i32) -> (i32, i32) {
    %c0_i32 = arith.constant 0 : i32
    %c0_i32_0 = arith.constant 0 : i32
    %c0_i32_1 = arith.constant 0 : i32
    return %c0_i32, %c0_i32_0 : i32, i32
  }
  func.func @transform_3(%arg0: i32) -> (i32, i32) {
    %c0_i32 = arith.constant 0 : i32
    %c0_i32_0 = arith.constant 0 : i32
    %c0_i32_1 = arith.constant 0 : i32
    return %c0_i32, %c0_i32_0 : i32, i32
  }
  func.func @transform_4(%arg0: i32) -> (i32, i32, i32) {
    %c0_i32 = arith.constant 0 : i32
    %c0_i32_0 = arith.constant 0 : i32
    %c0_i32_1 = arith.constant 0 : i32
    %c0_i32_2 = arith.constant 0 : i32
    return %c0_i32, %c0_i32_0, %c0_i32_1 : i32, i32, i32
  }
  func.func @transform_5(%arg0: i32) -> (i32, i32) {
    %c0_i32 = arith.constant 0 : i32
    %c0_i32_0 = arith.constant 0 : i32
    %c0_i32_1 = arith.constant 0 : i32
    return %c0_i32, %c0_i32_0 : i32, i32
  }
  func.func @transform_6(%arg0: i32) -> (i32, i32, i32) {
    %c0_i32 = arith.constant 0 : i32
    %c0_i32_0 = arith.constant 0 : i32
    %c0_i32_1 = arith.constant 0 : i32
    return %arg0, %c0_i32, %c0_i32_0 : i32, i32, i32
  }
}

</mosaic_0001>

<llo_original>
// kernel: tpu_custom_call.1
$region0: #{tpu_custom_call.1}
  #allocation0 [shape = 'u32[]', space=smem, size = 0x4, offset = 0x4, fixed_abs, tag = 'smem constant byte address 0x4 - core index']
  #allocation1 [shape = 'u32[144,128]{1,0:T(1,128)}', space=vmem, size = 0x12000, scoped, tag = 'internal scratch']
  %s0 = inlined_call_operand.vmem [shape: f32[2,8,32], index: 0, kind: input, shape index: {}]
  %s1 = inlined_call_operand.vmem [shape: f32[1,32], index: 1, kind: input, shape index: {}]
  %s2 = inlined_call_operand.vmem [shape: f32[1,32], index: 2, kind: input, shape index: {}]
  %s3 = inlined_call_operand.vmem [shape: f32[192,32], index: 3, kind: input, shape index: {}]
  %s4 = inlined_call_operand.vmem [shape: f32[4,16,32], index: 4, kind: input, shape index: {}]
  %s5 = inlined_call_operand.vmem [shape: f32[1,32], index: 5, kind: input, shape index: {}]
  %s6 = inlined_call_operand.hbm [shape: f32[2,8,32], index: 6, kind: output, shape index: {}]
  %s7 = sld [smem:[#allocation0]]
  $region57: #{tpu_custom_call.1} parent=0
    _
  %s9 = ssub.s32 1, %s7
  %s10 = scalar_select 0, %s9, %s7
  $region1: #{tpu_custom_call.1} parent=0
    #allocation2 [shape = 'u8[8192]{0}', space=vmem, size = 0x2000, scoped, tag = 'output window, operand 0']
    #allocation3 [shape = 's32[2]{0}', space=sflag, size = 0x8, scoped, tag = 'scoped memory for tpu_custom_call.1']
    %11 = vsyncpa [#allocation3], 0
    %s12 = scalar_lea.sflag [#allocation3], 1
    %13 = vsyncpa %s12, 0
    loop: start=0, step=1, limit=4
    $region2: #{tpu_custom_call.1} parent=1 // loop_pre_header
      _
    $region3: #{tpu_custom_call.1} parent=1 // loop_header
      %s15 = sphi 0, %s19
      %p16 = scmp.ge.s32.totalorder %s15, 4
      %s25 = sphi 0, %s27
      %s28 = sphi 0, %s25
      %s29 = sphi 0, %s28
      %s45 = sphi 0, %s29
      %s49 = sphi 0, %s49
      %s51 = sphi 0, %s49
      %s52 = sphi 0, %s51
      %s66 = sphi 0, %s52
      %s70 = sphi 0, %s70
      %s72 = sphi 0, %s70
      %s73 = sphi 0, %s72
      %s87 = sphi 0, %s73
      %s91 = sphi 0, %s91
      %s93 = sphi 0, %s91
      %s94 = sphi 0, %s93
      %s108 = sphi 0, %s94
      %s112 = sphi 0, %s112
      %s114 = sphi 0, %s112
      %s115 = sphi 0, %s114
      %s129 = sphi 0, %s115
      %s133 = sphi 0, %s133
      %s135 = sphi 0, %s133
      %s136 = sphi 0, %s135
      %s150 = sphi 0, %s136
      %s156 = sphi 0, %s158
      %s159 = sphi 0, %s156
      %s160 = sphi 0, %s159
      %s176 = sphi 0, %s160
    $region4: #{tpu_custom_call.1} parent=1 // loop_header_branch
      %18 = sbr.rel (%p16) target = $region8
    $region5: #{tpu_custom_call.1} parent=1 // loop_body
      %s20 = ssub.s32 %s15, 1
      %s21 = ssub.s32 %s15, 2
      %s22 = sadd.s32 %s15, 1
      %s23 = ssub.s32 %s15, %s22
      %p24 = scmp.eq.s32.totalorder %s23, 0
      %s26 = sadd.s32 %s25, 1
      %s27 = scalar_select %p24, %s25, %s26
      %p30 = pneg %p24
      %p31 = scmp.eq.s32.totalorder %s15, 1
      %p32 = por %p30, %p31
      %p33 = scmp.ne.s32.totalorder %s25, %s28
      %p34 = scmp.eq.s32.totalorder %s15, 0
      %p35 = por %p33, %p34
      %p36 = scmp.ne.s32.totalorder %s25, %s28
      %p37 = scmp.eq.s32.totalorder %s20, 1
      %p38 = por %p36, %p37
      %p39 = scmp.ne.s32.totalorder %s28, %s29
      %p40 = scmp.eq.s32.totalorder %s20, 0
      %p41 = por %p39, %p40
      %p42 = scmp.ne.s32.totalorder %s28, %s29
      %p43 = scmp.eq.s32.totalorder %s21, 1
      %p44 = por %p42, %p43
      %p46 = scmp.ne.s32.totalorder %s29, %s45
      %p47 = scmp.eq.s32.totalorder %s21, 0
      %p48 = por %p46, %p47
      %s50 = sadd.s32 %s49, 1
      %p53 = scmp.eq.s32.totalorder %s15, 1
      %p54 = scmp.ne.s32.totalorder %s49, %s51
      %p55 = scmp.eq.s32.totalorder %s15, 0
      %p56 = por %p54, %p55
      %p57 = scmp.ne.s32.totalorder %s49, %s51
      %p58 = scmp.eq.s32.totalorder %s20, 1
      %p59 = por %p57, %p58
      %p60 = scmp.ne.s32.totalorder %s51, %s52
      %p61 = scmp.eq.s32.totalorder %s20, 0
      %p62 = por %p60, %p61
      %p63 = scmp.ne.s32.totalorder %s51, %s52
      %p64 = scmp.eq.s32.totalorder %s21, 1
      %p65 = por %p63, %p64
      %p67 = scmp.ne.s32.totalorder %s52, %s66
      %p68 = scmp.eq.s32.totalorder %s21, 0
      %p69 = por %p67, %p68
      %s71 = sadd.s32 %s70, 1
      %p74 = scmp.eq.s32.totalorder %s15, 1
      %p75 = scmp.ne.s32.totalorder %s70, %s72
      %p76 = scmp.eq.s32.totalorder %s15, 0
      %p77 = por %p75, %p76
      %p78 = scmp.ne.s32.totalorder %s70, %s72
      %p79 = scmp.eq.s32.totalorder %s20, 1
      %p80 = por %p78, %p79
      %p81 = scmp.ne.s32.totalorder %s72, %s73
      %p82 = scmp.eq.s32.totalorder %s20, 0
      %p83 = por %p81, %p82
      %p84 = scmp.ne.s32.totalorder %s72, %s73
      %p85 = scmp.eq.s32.totalorder %s21, 1
      %p86 = por %p84, %p85
      %p88 = scmp.ne.s32.totalorder %s73, %s87
      %p89 = scmp.eq.s32.totalorder %s21, 0
      %p90 = por %p88, %p89
      %s92 = sadd.s32 %s91, 1
      %p95 = scmp.eq.s32.totalorder %s15, 1
      %p96 = scmp.ne.s32.totalorder %s91, %s93
      %p97 = scmp.eq.s32.totalorder %s15, 0
      %p98 = por %p96, %p97
      %p99 = scmp.ne.s32.totalorder %s91, %s93
      %p100 = scmp.eq.s32.totalorder %s20, 1
      %p101 = por %p99, %p100
      %p102 = scmp.ne.s32.totalorder %s93, %s94
      %p103 = scmp.eq.s32.totalorder %s20, 0
      %p104 = por %p102, %p103
      %p105 = scmp.ne.s32.totalorder %s93, %s94
      %p106 = scmp.eq.s32.totalorder %s21, 1
      %p107 = por %p105, %p106
      %p109 = scmp.ne.s32.totalorder %s94, %s108
      %p110 = scmp.eq.s32.totalorder %s21, 0
      %p111 = por %p109, %p110
      %s113 = sadd.s32 %s112, 1
      %p116 = scmp.eq.s32.totalorder %s15, 1
      %p117 = scmp.ne.s32.totalorder %s112, %s114
      %p118 = scmp.eq.s32.totalorder %s15, 0
      %p119 = por %p117, %p118
      %p120 = scmp.ne.s32.totalorder %s112, %s114
      %p121 = scmp.eq.s32.totalorder %s20, 1
      %p122 = por %p120, %p121
      %p123 = scmp.ne.s32.totalorder %s114, %s115
      %p124 = scmp.eq.s32.totalorder %s20, 0
      %p125 = por %p123, %p124
      %p126 = scmp.ne.s32.totalorder %s114, %s115
      %p127 = scmp.eq.s32.totalorder %s21, 1
      %p128 = por %p126, %p127
      %p130 = scmp.ne.s32.totalorder %s115, %s129
      %p131 = scmp.eq.s32.totalorder %s21, 0
      %p132 = por %p130, %p131
      %s134 = sadd.s32 %s133, 1
      %p137 = scmp.eq.s32.totalorder %s15, 1
      %p138 = scmp.ne.s32.totalorder %s133, %s135
      %p139 = scmp.eq.s32.totalorder %s15, 0
      %p140 = por %p138, %p139
      %p141 = scmp.ne.s32.totalorder %s133, %s135
      %p142 = scmp.eq.s32.totalorder %s20, 1
      %p143 = por %p141, %p142
      %p144 = scmp.ne.s32.totalorder %s135, %s136
      %p145 = scmp.eq.s32.totalorder %s20, 0
      %p146 = por %p144, %p145
      %p147 = scmp.ne.s32.totalorder %s135, %s136
      %p148 = scmp.eq.s32.totalorder %s21, 1
      %p149 = por %p147, %p148
      %p151 = scmp.ne.s32.totalorder %s136, %s150
      %p152 = scmp.eq.s32.totalorder %s21, 0
      %p153 = por %p151, %p152
      %s154 = ssub.s32 %s15, %s22
      %p155 = scmp.eq.s32.totalorder %s154, 0
      %s157 = sadd.s32 %s156, 1
      %s158 = scalar_select %p155, %s156, %s157
      %p161 = pneg %p155
      %p162 = scmp.eq.s32.totalorder %s15, 1
      %p163 = por %p161, %p162
      %p164 = scmp.ne.s32.totalorder %s156, %s159
      %p165 = scmp.eq.s32.totalorder %s15, 0
      %p166 = por %p164, %p165
      %p167 = scmp.ne.s32.totalorder %s156, %s159
      %p168 = scmp.eq.s32.totalorder %s20, 1
      %p169 = por %p167, %p168
      %p170 = scmp.ne.s32.totalorder %s159, %s160
      %p171 = scmp.eq.s32.totalorder %s20, 0
      %p172 = por %p170, %p171
      %p173 = scmp.ne.s32.totalorder %s159, %s160
      %p174 = scmp.eq.s32.totalorder %s21, 1
      %p175 = por %p173, %p174
      %p177 = scmp.ne.s32.totalorder %s160, %s176
      %p178 = scmp.eq.s32.totalorder %s21, 0
      %p179 = por %p177, %p178
      %p180 = scmp.le.s32.totalorder 1, %s15
      %p181 = scmp.lt.s32.totalorder %s15, 3
      %p182 = pnand %p180, %p181
      %p183 = pneg %p182
      // Predicated region
      $region9: #{tpu_custom_call.1} parent=5 // pred_check
        _
      $region10: #{tpu_custom_call.1} parent=5 // pred_check_branch
        %185 = sbr.rel (%p182) target = $region12
      $region11: #{tpu_custom_call.1} parent=5 // pred_region
        %s186 = ssub.s32 %s15, 1
        // Predicated region
        $region13: #{tpu_custom_call.1} parent=11 // pred_check
          %p187 = pneg %p62
        $region14: #{tpu_custom_call.1} parent=11 // pred_check_branch
          %189 = sbr.rel (%p187) target = $region16
        $region15: #{tpu_custom_call.1} parent=11 // pred_region
          _
        $region16: #{tpu_custom_call.1} parent=11 // pred_fallthru
          _
        // Predicated region
        $region17: #{tpu_custom_call.1} parent=11 // pred_check
          %p190 = pneg %p83
        $region18: #{tpu_custom_call.1} parent=11 // pred_check_branch
          %192 = sbr.rel (%p190) target = $region20
        $region19: #{tpu_custom_call.1} parent=11 // pred_region
          _
        $region20: #{tpu_custom_call.1} parent=11 // pred_fallthru
          _
        // Predicated region
        $region21: #{tpu_custom_call.1} parent=11 // pred_check
          %p193 = pneg %p104
        $region22: #{tpu_custom_call.1} parent=11 // pred_check_branch
          %195 = sbr.rel (%p193) target = $region24
        $region23: #{tpu_custom_call.1} parent=11 // pred_region
          _
        $region24: #{tpu_custom_call.1} parent=11 // pred_fallthru
          _
        // Predicated region
        $region25: #{tpu_custom_call.1} parent=11 // pred_check
          %p196 = pneg %p125
        $region26: #{tpu_custom_call.1} parent=11 // pred_check_branch
          %198 = sbr.rel (%p196) target = $region28
        $region27: #{tpu_custom_call.1} parent=11 // pred_region
          _
        $region28: #{tpu_custom_call.1} parent=11 // pred_fallthru
          _
        // Predicated region
        $region29: #{tpu_custom_call.1} parent=11 // pred_check
          %p199 = pneg %p146
        $region30: #{tpu_custom_call.1} parent=11 // pred_check_branch
          %201 = sbr.rel (%p199) target = $region32
        $region31: #{tpu_custom_call.1} parent=11 // pred_region
          _
        $region32: #{tpu_custom_call.1} parent=11 // pred_fallthru
          _
      $region12: #{tpu_custom_call.1} parent=5 // pred_fallthru
        _
      %p202 = scmp.lt.s32.totalorder %s15, 2
      // Predicated region
      $region33: #{tpu_custom_call.1} parent=5 // pred_check
        %p203 = pneg %p202
      $region34: #{tpu_custom_call.1} parent=5 // pred_check_branch
        %205 = sbr.rel (%p203) target = $region36
      $region35: #{tpu_custom_call.1} parent=5 // pred_region
        // Predicated region
        $region37: #{tpu_custom_call.1} parent=35 // pred_check
          %p206 = pneg %p35
        $region38: #{tpu_custom_call.1} parent=35 // pred_check_branch
          %208 = sbr.rel (%p206) target = $region40
        $region39: #{tpu_custom_call.1} parent=35 // pred_region
          %p209 = scmp.lt.s32.totalorder %s15, 1
          %s210 = scalar_select %p209, %s15, 1
          %s211 = smul.addr %s210, 8
          %s212 = scalar_lea.vmem %s0, %s211
        $region40: #{tpu_custom_call.1} parent=35 // pred_fallthru
          _
      $region36: #{tpu_custom_call.1} parent=5 // pred_fallthru
        _
      %p213 = scmp.le.s32.totalorder 1, %s15
      %p214 = scmp.lt.s32.totalorder %s15, 3
      %p215 = pnand %p213, %p214
      %p216 = pneg %p215
      // Predicated region
      $region41: #{tpu_custom_call.1} parent=5 // pred_check
        _
      $region42: #{tpu_custom_call.1} parent=5 // pred_check_branch
        %218 = sbr.rel (%p215) target = $region44
      $region43: #{tpu_custom_call.1} parent=5 // pred_region
        %s219 = ssub.s32 %s15, 1
        %p220 = scmp.lt.s32.totalorder %s20, 1
        %s221 = scalar_select %p220, %s20, 1
        %s222 = smul.addr %s221, 8
        %s223 = scalar_lea.vmem %s0, %s222
        %p224 = pneg %p41
        %p225 = pneg %p38
        %p226 = pneg %p62
        %p227 = pneg %p59
        %p228 = pneg %p83
        %p229 = pneg %p80
        %p230 = pneg %p104
        %p231 = pneg %p101
        %p232 = pneg %p125
        %p233 = pneg %p122
        %p234 = pneg %p146
        %p235 = pneg %p143
        %p236 = pneg %p172
        %p237 = pneg %p169
        %s238 = sand.u32 %s159, 1
        %s239 = scalar_lea.sflag [#allocation3], %s238
        %s240 = sand.u32 %s159, 1
        %s241 = smul.addr %s240, 8
        %s242 = scalar_lea.vmem [#allocation2], %s241
        %p243 = scmp.lt.s32.totalorder %s20, 1
        %s244 = scalar_select %p243, %s20, 1
        %s245 = smul.addr %s244, 8
        %s246 = scalar_lea.vmem %s0, %s245
        %v247 = vld [vmem:[%s246] sm:$0xff]
        %vm248 = vcmask 261120
        %v249 = vsel %vm248, %v247, 0.0
        %250 = vadd.xlane.f32.xlu0 %v249
        %v251 = vpop.xlane.xlu0 %250
        %v252 = vrcp.pop 32.0
        %v253 = vmul.f32 %v251, %v252
        %v254 = vsub.f32 %v247, %v253
        %v255 = vmul.f32 %v254, %v254
        %v256 = vsel %vm248, %v255, 0.0
        %257 = vadd.xlane.f32.xlu0 %v256
        %v258 = vpop.xlane.xlu0 %257
        %v259 = vmul.f32 %v258, %v252
        %v260 = vadd.f32 %v259, 1e-05
        %v261 = vrsqrt.pop %v260
        %v262 = vmul.f32 %v254, %v261
        %v263 = vld [vmem:[%s1] sm:$0x1]
        %v265 = vlaneseq
        %v266 = vshrl.u32 %v265, 7
        %v267 = vsub.s32 0, %v266
        %v268 = vrot.slane %v263, %v267
        %v270 = vmul.f32 %v262, %v268
        %v271 = vld [vmem:[%s2] sm:$0x1]
        %v273 = vlaneseq
        %v274 = vshrl.u32 %v273, 7
        %v275 = vsub.s32 0, %v274
        %v276 = vrot.slane %v271, %v275
        %v278 = vadd.f32 %v270, %v276
        %v279 = vld [vmem:[%s3] sm:$0xff]
        %v280 = vld [vmem:[%s3 + $0x8] sm:$0xff]
        %v281 = vld [vmem:[%s3 + $0x10] sm:$0xff]
        %v282 = vld [vmem:[%s3 + $0x18] sm:$0xff]
        %v283 = vld [vmem:[%s3 + $0x20] sm:$0xff]
        %v284 = vld [vmem:[%s3 + $0x28] sm:$0xff]
        %v285 = vld [vmem:[%s3 + $0x30] sm:$0xff]
        %v286 = vld [vmem:[%s3 + $0x38] sm:$0xff]
        %v287 = vld [vmem:[%s3 + $0x40] sm:$0xff]
        %v288 = vld [vmem:[%s3 + $0x48] sm:$0xff]
        %v289 = vld [vmem:[%s3 + $0x50] sm:$0xff]
        %v290 = vld [vmem:[%s3 + $0x58] sm:$0xff]
        %v291 = vld [vmem:[%s3 + $0x60] sm:$0xff]
        %v292 = vld [vmem:[%s3 + $0x68] sm:$0xff]
        %v293 = vld [vmem:[%s3 + $0x70] sm:$0xff]
        %v294 = vld [vmem:[%s3 + $0x78] sm:$0xff]
        %v295 = vld [vmem:[%s3 + $0x80] sm:$0xff]
        %v296 = vld [vmem:[%s3 + $0x88] sm:$0xff]
        %v297 = vld [vmem:[%s3 + $0x90] sm:$0xff]
        %v298 = vld [vmem:[%s3 + $0x98] sm:$0xff]
        %v299 = vld [vmem:[%s3 + $0xa0] sm:$0xff]
        %v300 = vld [vmem:[%s3 + $0xa8] sm:$0xff]
        %v301 = vld [vmem:[%s3 + $0xb0] sm:$0xff]
        %v302 = vld [vmem:[%s3 + $0xb8] sm:$0xff]
        %v304 = vsel %vm248, %v279, 0
        %v307 = vsel %vm248, %v280, 0
        %v310 = vsel %vm248, %v281, 0
        %v313 = vsel %vm248, %v282, 0
        %v316 = vsel %vm248, %v283, 0
        %v319 = vsel %vm248, %v284, 0
        %v322 = vsel %vm248, %v285, 0
        %v325 = vsel %vm248, %v286, 0
        %v328 = vsel %vm248, %v287, 0
        %v331 = vsel %vm248, %v288, 0
        %v334 = vsel %vm248, %v289, 0
        %v337 = vsel %vm248, %v290, 0
        %v340 = vsel %vm248, %v291, 0
        %v343 = vsel %vm248, %v292, 0
        %v346 = vsel %vm248, %v293, 0
        %v349 = vsel %vm248, %v294, 0
        %v352 = vsel %vm248, %v295, 0
        %v355 = vsel %vm248, %v296, 0
        %v358 = vsel %vm248, %v297, 0
        %v361 = vsel %vm248, %v298, 0
        %v364 = vsel %vm248, %v299, 0
        %v367 = vsel %vm248, %v300, 0
        %v370 = vsel %vm248, %v301, 0
        %v373 = vsel %vm248, %v302, 0
        %v376 = vsel %vm248, %v278, 0
        %378 = vmatprep.subr.mxu0 0.0
        %379 = vmatpush1.xpose.msra.mxu0 %v376
        %380 = vmatprep.subr.mxu0 0.0
        %381 = vmatpush1.xpose.msra.mxu0 0.0
        %382 = vmatprep.subr.mxu0 0.0
        %383 = vmatpush1.xpose.msra.mxu0 0.0
        %384 = vmatprep.subr.mxu0 0.0
        %385 = vmatpush1.xpose.msra.mxu0 0.0
        %386 = vmatprep.subr.mxu0 0.0
        %387 = vmatpush1.xpose.msra.mxu0 0.0
        %388 = vmatprep.subr.mxu0 0.0
        %389 = vmatpush1.xpose.msra.mxu0 0.0
        %390 = vmatprep.subr.mxu0 0.0
        %391 = vmatpush1.xpose.msra.mxu0 0.0
        %392 = vmatprep.subr.mxu0 0.0
        %393 = vmatpush1.xpose.msra.mxu0 0.0
        %394 = vmatprep.subr.mxu0 0.0
        %395 = vmatpush1.xpose.msra.mxu0 0.0
        %396 = vmatprep.subr.mxu0 0.0
        %397 = vmatpush1.xpose.msra.mxu0 0.0
        %398 = vmatprep.subr.mxu0 0.0
        %399 = vmatpush1.xpose.msra.mxu0 0.0
        %400 = vmatprep.subr.mxu0 0.0
        %401 = vmatpush1.xpose.msra.mxu0 0.0
        %402 = vmatprep.subr.mxu0 0.0
        %403 = vmatpush1.xpose.msra.mxu0 0.0
        %404 = vmatprep.subr.mxu0 0.0
        %405 = vmatpush1.xpose.msra.mxu0 0.0
        %406 = vmatprep.subr.mxu0 0.0
        %407 = vmatpush1.xpose.msra.mxu0 0.0
        %408 = vmatprep.subr.mxu0 0.0
        %409 = vmatpush1.xpose.msra.mxu0 0.0
        %410 = vmatprep.subr.mxu0 0.0
        %411 = vmatpush1.xpose.msra.mxu0 0.0
        %412 = vmatprep.subr.mxu0 0.0
        %413 = vmatpush1.xpose.msra.mxu0 0.0
        %414 = vmatprep.subr.mxu0 0.0
        %415 = vmatpush1.xpose.msra.mxu0 0.0
        %416 = vmatprep.subr.mxu0 0.0
        %417 = vmatpush1.xpose.msra.mxu0 0.0
        %418 = vmatprep.subr.mxu0 0.0
        %419 = vmatpush1.xpose.msra.mxu0 0.0
        %420 = vmatprep.subr.mxu0 0.0
        %421 = vmatpush1.xpose.msra.mxu0 0.0
        %422 = vmatprep.subr.mxu0 0.0
        %423 = vmatpush1.xpose.msra.mxu0 0.0
        %424 = vmatprep.subr.mxu0 0.0
        %425 = vmatpush1.xpose.msra.mxu0 0.0
        %426 = vmatprep.subr.mxu0 0.0
        %427 = vmatpush1.xpose.msra.mxu0 0.0
        %428 = vmatprep.subr.mxu0 0.0
        %429 = vmatpush1.xpose.msra.mxu0 0.0
        %430 = vmatprep.subr.mxu0 0.0
        %431 = vmatpush1.xpose.msra.mxu0 0.0
        %432 = vmatprep.subr.mxu0 0.0
        %433 = vmatpush1.xpose.msra.mxu0 0.0
        %434 = vmatprep.subr.mxu0 0.0
        %435 = vmatpush1.xpose.msra.mxu0 0.0
        %436 = vmatprep.subr.mxu0 0.0
        %437 = vmatpush1.xpose.msra.mxu0 0.0
        %438 = vmatprep.subr.mxu0 0.0
        %439 = vmatpush1.xpose.msra.mxu0 0.0
        %440 = vmatprep.subr.mxu0 0.0
        %441 = vmatpush1.xpose.msra.mxu0 0.0
        %442 = vmatprep.mubr.f32.mxu0 0.0
        %443 = vmatmul.mubr.f32.gmra.mrb[0].mxu0 %v304
        %v444 = vpop.f32.mrb[0].mxu0
        %v445 = vadd.f32 0.0, %v444
        %v446 = vpop.f32.mrb[0].mxu0
        %447 = vmatprep.mubr.f32.mxu0 0.0
        %448 = vmatmul.mubr.f32.gmra.mrb[0].mxu0 %v307
        %v449 = vpop.f32.mrb[0].mxu0
        %v450 = vadd.f32 0.0, %v449
        %v451 = vpop.f32.mrb[0].mxu0
        %452 = vmatprep.mubr.f32.mxu0 0.0
        %453 = vmatmul.mubr.f32.gmra.mrb[0].mxu0 %v310
        %v454 = vpop.f32.mrb[0].mxu0
        %v455 = vadd.f32 0.0, %v454
        %v456 = vpop.f32.mrb[0].mxu0
        %457 = vmatprep.mubr.f32.mxu0 0.0
        %458 = vmatmul.mubr.f32.gmra.mrb[0].mxu0 %v313
        %v459 = vpop.f32.mrb[0].mxu0
        %v460 = vadd.f32 0.0, %v459
        %v461 = vpop.f32.mrb[0].mxu0
        %462 = vmatprep.mubr.f32.mxu0 0.0
        %463 = vmatmul.mubr.f32.gmra.mrb[0].mxu0 %v316
        %v464 = vpop.f32.mrb[0].mxu0
        %v465 = vadd.f32 0.0, %v464
        %v466 = vpop.f32.mrb[0].mxu0
        %467 = vmatprep.mubr.f32.mxu0 0.0
        %468 = vmatmul.mubr.f32.gmra.mrb[0].mxu0 %v319
        %v469 = vpop.f32.mrb[0].mxu0
        %v470 = vadd.f32 0.0, %v469
        %v471 = vpop.f32.mrb[0].mxu0
        %472 = vmatprep.mubr.f32.mxu0 0.0
        %473 = vmatmul.mubr.f32.gmra.mrb[0].mxu0 %v322
        %v474 = vpop.f32.mrb[0].mxu0
        %v475 = vadd.f32 0.0, %v474
        %v476 = vpop.f32.mrb[0].mxu0
        %477 = vmatprep.mubr.f32.mxu0 0.0
        %478 = vmatmul.mubr.f32.gmra.mrb[0].mxu0 %v325
        %v479 = vpop.f32.mrb[0].mxu0
        %v480 = vadd.f32 0.0, %v479
        %v481 = vpop.f32.mrb[0].mxu0
        %482 = vmatprep.mubr.f32.mxu0 0.0
        %483 = vmatmul.mubr.f32.gmra.mrb[0].mxu0 %v328
        %v484 = vpop.f32.mrb[0].mxu0
        %v485 = vadd.f32 0.0, %v484
        %v486 = vpop.f32.mrb[0].mxu0
        %487 = vmatprep.mubr.f32.mxu0 0.0
        %488 = vmatmul.mubr.f32.gmra.mrb[0].mxu0 %v331
        %v489 = vpop.f32.mrb[0].mxu0
        %v490 = vadd.f32 0.0, %v489
        %v491 = vpop.f32.mrb[0].mxu0
        %492 = vmatprep.mubr.f32.mxu0 0.0
        %493 = vmatmul.mubr.f32.gmra.mrb[0].mxu0 %v334
        %v494 = vpop.f32.mrb[0].mxu0
        %v495 = vadd.f32 0.0, %v494
        %v496 = vpop.f32.mrb[0].mxu0
        %497 = vmatprep.mubr.f32.mxu0 0.0
        %498 = vmatmul.mubr.f32.gmra.mrb[0].mxu0 %v337
        %v499 = vpop.f32.mrb[0].mxu0
        %v500 = vadd.f32 0.0, %v499
        %v501 = vpop.f32.mrb[0].mxu0
        %502 = vmatprep.mubr.f32.mxu0 0.0
        %503 = vmatmul.mubr.f32.gmra.mrb[0].mxu0 %v340
        %v504 = vpop.f32.mrb[0].mxu0
        %v505 = vadd.f32 0.0, %v504
        %v506 = vpop.f32.mrb[0].mxu0
        %507 = vmatprep.mubr.f32.mxu0 0.0
        %508 = vmatmul.mubr.f32.gmra.mrb[0].mxu0 %v343
        %v509 = vpop.f32.mrb[0].mxu0
        %v510 = vadd.f32 0.0, %v509
        %v511 = vpop.f32.mrb[0].mxu0
        %512 = vmatprep.mubr.f32.mxu0 0.0
        %513 = vmatmul.mubr.f32.gmra.mrb[0].mxu0 %v346
        %v514 = vpop.f32.mrb[0].mxu0
        %v515 = vadd.f32 0.0, %v514
        %v516 = vpop.f32.mrb[0].mxu0
        %517 = vmatprep.mubr.f32.mxu0 0.0
        %518 = vmatmul.mubr.f32.gmra.mrb[0].mxu0 %v349
        %v519 = vpop.f32.mrb[0].mxu0
        %v520 = vadd.f32 0.0, %v519
        %v521 = vpop.f32.mrb[0].mxu0
        %522 = vmatprep.mubr.f32.mxu0 0.0
        %523 = vmatmul.mubr.f32.gmra.mrb[0].mxu0 %v352
        %v524 = vpop.f32.mrb[0].mxu0
        %v525 = vadd.f32 0.0, %v524
        %v526 = vpop.f32.mrb[0].mxu0
        %527 = vmatprep.mubr.f32.mxu0 0.0
        %528 = vmatmul.mubr.f32.gmra.mrb[0].mxu0 %v355
        %v529 = vpop.f32.mrb[0].mxu0
        %v530 = vadd.f32 0.0, %v529
        %v531 = vpop.f32.mrb[0].mxu0
        %532 = vmatprep.mubr.f32.mxu0 0.0
        %533 = vmatmul.mubr.f32.gmra.mrb[0].mxu0 %v358
        %v534 = vpop.f32.mrb[0].mxu0
        %v535 = vadd.f32 0.0, %v534
        %v536 = vpop.f32.mrb[0].mxu0
        %537 = vmatprep.mubr.f32.mxu0 0.0
        %538 = vmatmul.mubr.f32.gmra.mrb[0].mxu0 %v361
        %v539 = vpop.f32.mrb[0].mxu0
        %v540 = vadd.f32 0.0, %v539
        %v541 = vpop.f32.mrb[0].mxu0
        %542 = vmatprep.mubr.f32.mxu0 0.0
        %543 = vmatmul.mubr.f32.gmra.mrb[0].mxu0 %v364
        %v544 = vpop.f32.mrb[0].mxu0
        %v545 = vadd.f32 0.0, %v544
        %v546 = vpop.f32.mrb[0].mxu0
        %547 = vmatprep.mubr.f32.mxu0 0.0
        %548 = vmatmul.mubr.f32.gmra.mrb[0].mxu0 %v367
        %v549 = vpop.f32.mrb[0].mxu0
        %v550 = vadd.f32 0.0, %v549
        %v551 = vpop.f32.mrb[0].mxu0
        %552 = vmatprep.mubr.f32.mxu0 0.0
        %553 = vmatmul.mubr.f32.gmra.mrb[0].mxu0 %v370
        %v554 = vpop.f32.mrb[0].mxu0
        %v555 = vadd.f32 0.0, %v554
        %v556 = vpop.f32.mrb[0].mxu0
        %557 = vmatprep.mubr.f32.mxu0 0.0
        %558 = vmatmul.mubr.f32.gmra.mrb[0].mxu0 %v373
        %v559 = vpop.f32.mrb[0].mxu0
        %v560 = vadd.f32 0.0, %v559
        %v561 = vpop.f32.mrb[0].mxu0
        %562 = vdwg.mxu0
        %563 = vxpose.xlu0.b32.start [1/16] %v445, 128
        %564 = vxpose.xlu0.b32.cont [2/16] %v450, 128
        %565 = vxpose.xlu0.b32.cont [3/16] 0.0, 128
        %566 = vxpose.xlu0.b32.cont [4/16] 0.0, 128
        %567 = vxpose.xlu0.b32.cont [5/16] 0.0, 128
        %568 = vxpose.xlu0.b32.cont [6/16] 0.0, 128
        %569 = vxpose.xlu0.b32.cont [7/16] 0.0, 128
        %570 = vxpose.xlu0.b32.cont [8/16] 0.0, 128
        %571 = vxpose.xlu0.b32.cont [9/16] 0.0, 128
        %572 = vxpose.xlu0.b32.cont [10/16] 0.0, 128
        %573 = vxpose.xlu0.b32.cont [11/16] 0.0, 128
        %574 = vxpose.xlu0.b32.cont [12/16] 0.0, 128
        %575 = vxpose.xlu0.b32.cont [13/16] 0.0, 128
        %576 = vxpose.xlu0.b32.cont [14/16] 0.0, 128
        %577 = vxpose.xlu0.b32.cont [15/16] 0.0, 128
        %578 = vxpose.xlu0.b32.end [16/16] 0.0, 128
        %v579 = vpop.trf.xlu0
        %v580 = vpop.trf.xlu0
        %v581 = vpop.trf.xlu0
        %v582 = vpop.trf.xlu0
        %v583 = vpop.trf.xlu0
        %v584 = vpop.trf.xlu0
        %v585 = vpop.trf.xlu0
        %v586 = vpop.trf.xlu0
        %v587 = vpop.trf.xlu0
        %v588 = vpop.trf.xlu0
        %v589 = vpop.trf.xlu0
        %v590 = vpop.trf.xlu0
        %v591 = vpop.trf.xlu0
        %v592 = vpop.trf.xlu0
        %v593 = vpop.trf.xlu0
        %v594 = vpop.trf.xlu0
        %595 = vxpose.xlu0.b32.start [1/16] %v455, 128
        %596 = vxpose.xlu0.b32.cont [2/16] %v460, 128
        %597 = vxpose.xlu0.b32.cont [3/16] 0.0, 128
        %598 = vxpose.xlu0.b32.cont [4/16] 0.0, 128
        %599 = vxpose.xlu0.b32.cont [5/16] 0.0, 128
        %600 = vxpose.xlu0.b32.cont [6/16] 0.0, 128
        %601 = vxpose.xlu0.b32.cont [7/16] 0.0, 128
        %602 = vxpose.xlu0.b32.cont [8/16] 0.0, 128
        %603 = vxpose.xlu0.b32.cont [9/16] 0.0, 128
        %604 = vxpose.xlu0.b32.cont [10/16] 0.0, 128
        %605 = vxpose.xlu0.b32.cont [11/16] 0.0, 128
        %606 = vxpose.xlu0.b32.cont [12/16] 0.0, 128
        %607 = vxpose.xlu0.b32.cont [13/16] 0.0, 128
        %608 = vxpose.xlu0.b32.cont [14/16] 0.0, 128
        %609 = vxpose.xlu0.b32.cont [15/16] 0.0, 128
        %610 = vxpose.xlu0.b32.end [16/16] 0.0, 128
        %v611 = vpop.trf.xlu0
        %v612 = vpop.trf.xlu0
        %v613 = vpop.trf.xlu0
        %v614 = vpop.trf.xlu0
        %v615 = vpop.trf.xlu0
        %v616 = vpop.trf.xlu0
        %v617 = vpop.trf.xlu0
        %v618 = vpop.trf.xlu0
        %v619 = vpop.trf.xlu0
        %v620 = vpop.trf.xlu0
        %v621 = vpop.trf.xlu0
        %v622 = vpop.trf.xlu0
        %v623 = vpop.trf.xlu0
        %v624 = vpop.trf.xlu0
        %v625 = vpop.trf.xlu0
        %v626 = vpop.trf.xlu0
        %627 = vxpose.xlu0.b32.start [1/16] %v465, 128
        %628 = vxpose.xlu0.b32.cont [2/16] %v470, 128
        %629 = vxpose.xlu0.b32.cont [3/16] 0.0, 128
        %630 = vxpose.xlu0.b32.cont [4/16] 0.0, 128
        %631 = vxpose.xlu0.b32.cont [5/16] 0.0, 128
        %632 = vxpose.xlu0.b32.cont [6/16] 0.0, 128
        %633 = vxpose.xlu0.b32.cont [7/16] 0.0, 128
        %634 = vxpose.xlu0.b32.cont [8/16] 0.0, 128
        %635 = vxpose.xlu0.b32.cont [9/16] 0.0, 128
        %636 = vxpose.xlu0.b32.cont [10/16] 0.0, 128
        %637 = vxpose.xlu0.b32.cont [11/16] 0.0, 128
        %638 = vxpose.xlu0.b32.cont [12/16] 0.0, 128
        %639 = vxpose.xlu0.b32.cont [13/16] 0.0, 128
        %640 = vxpose.xlu0.b32.cont [14/16] 0.0, 128
        %641 = vxpose.xlu0.b32.cont [15/16] 0.0, 128
        %642 = vxpose.xlu0.b32.end [16/16] 0.0, 128
        %v643 = vpop.trf.xlu0
        %v644 = vpop.trf.xlu0
        %v645 = vpop.trf.xlu0
        %v646 = vpop.trf.xlu0
        %v647 = vpop.trf.xlu0
        %v648 = vpop.trf.xlu0
        %v649 = vpop.trf.xlu0
        %v650 = vpop.trf.xlu0
        %v651 = vpop.trf.xlu0
        %v652 = vpop.trf.xlu0
        %v653 = vpop.trf.xlu0
        %v654 = vpop.trf.xlu0
        %v655 = vpop.trf.xlu0
        %v656 = vpop.trf.xlu0
        %v657 = vpop.trf.xlu0
        %v658 = vpop.trf.xlu0
        %659 = vxpose.xlu0.b32.start [1/16] %v475, 128
        %660 = vxpose.xlu0.b32.cont [2/16] %v480, 128
        %661 = vxpose.xlu0.b32.cont [3/16] 0.0, 128
        %662 = vxpose.xlu0.b32.cont [4/16] 0.0, 128
        %663 = vxpose.xlu0.b32.cont [5/16] 0.0, 128
        %664 = vxpose.xlu0.b32.cont [6/16] 0.0, 128
        %665 = vxpose.xlu0.b32.cont [7/16] 0.0, 128
        %666 = vxpose.xlu0.b32.cont [8/16] 0.0, 128
        %667 = vxpose.xlu0.b32.cont [9/16] 0.0, 128
        %668 = vxpose.xlu0.b32.cont [10/16] 0.0, 128
        %669 = vxpose.xlu0.b32.cont [11/16] 0.0, 128
        %670 = vxpose.xlu0.b32.cont [12/16] 0.0, 128
        %671 = vxpose.xlu0.b32.cont [13/16] 0.0, 128
        %672 = vxpose.xlu0.b32.cont [14/16] 0.0, 128
        %673 = vxpose.xlu0.b32.cont [15/16] 0.0, 128
        %674 = vxpose.xlu0.b32.end [16/16] 0.0, 128
        %v675 = vpop.trf.xlu0
        %v676 = vpop.trf.xlu0
        %v677 = vpop.trf.xlu0
        %v678 = vpop.trf.xlu0
        %v679 = vpop.trf.xlu0
        %v680 = vpop.trf.xlu0
        %v681 = vpop.trf.xlu0
        %v682 = vpop.trf.xlu0
        %v683 = vpop.trf.xlu0
        %v684 = vpop.trf.xlu0
        %v685 = vpop.trf.xlu0
        %v686 = vpop.trf.xlu0
        %v687 = vpop.trf.xlu0
        %v688 = vpop.trf.xlu0
        %v689 = vpop.trf.xlu0
        %v690 = vpop.trf.xlu0
        %vm691 = vcmask 130048
        %v693 = vsel %vm691, %v579, 0
        %695 = vmatprep.subr.mxu0 0.0
        %696 = vmatpush1.msra.mxu0 %v485
        %697 = vmatprep.subr.mxu0 0.0
        %698 = vmatpush1.msra.mxu0 %v490
        %699 = vmatprep.subr.mxu0 0.0
        %700 = vmatpush1.msra.mxu0 0.0
        %701 = vmatprep.subr.mxu0 0.0
        %702 = vmatpush1.msra.mxu0 0.0
        %703 = vmatprep.subr.mxu0 0.0
        %704 = vmatpush1.msra.mxu0 0.0
        %705 = vmatprep.subr.mxu0 0.0
        %706 = vmatpush1.msra.mxu0 0.0
        %707 = vmatprep.subr.mxu0 0.0
        %708 = vmatpush1.msra.mxu0 0.0
        %709 = vmatprep.subr.mxu0 0.0
        %710 = vmatpush1.msra.mxu0 0.0
        %711 = vmatprep.subr.mxu0 0.0
        %712 = vmatpush1.msra.mxu0 0.0
        %713 = vmatprep.subr.mxu0 0.0
        %714 = vmatpush1.msra.mxu0 0.0
        %715 = vmatprep.subr.mxu0 0.0
        %716 = vmatpush1.msra.mxu0 0.0
        %717 = vmatprep.subr.mxu0 0.0
        %718 = vmatpush1.msra.mxu0 0.0
        %719 = vmatprep.subr.mxu0 0.0
        %720 = vmatpush1.msra.mxu0 0.0
        %721 = vmatprep.subr.mxu0 0.0
        %722 = vmatpush1.msra.mxu0 0.0
        %723 = vmatprep.subr.mxu0 0.0
        %724 = vmatpush1.msra.mxu0 0.0
        %725 = vmatprep.subr.mxu0 0.0
        %726 = vmatpush1.msra.mxu0 0.0
        %727 = vmatprep.subr.mxu0 0.0
        %728 = vmatpush1.msra.mxu0 0.0
        %729 = vmatprep.subr.mxu0 0.0
        %730 = vmatpush1.msra.mxu0 0.0
        %731 = vmatprep.subr.mxu0 0.0
        %732 = vmatpush1.msra.mxu0 0.0
        %733 = vmatprep.subr.mxu0 0.0
        %734 = vmatpush1.msra.mxu0 0.0
        %735 = vmatprep.subr.mxu0 0.0
        %736 = vmatpush1.msra.mxu0 0.0
        %737 = vmatprep.subr.mxu0 0.0
        %738 = vmatpush1.msra.mxu0 0.0
        %739 = vmatprep.subr.mxu0 0.0
        %740 = vmatpush1.msra.mxu0 0.0
        %741 = vmatprep.subr.mxu0 0.0
        %742 = vmatpush1.msra.mxu0 0.0
        %743 = vmatprep.subr.mxu0 0.0
        %744 = vmatpush1.msra.mxu0 0.0
        %745 = vmatprep.subr.mxu0 0.0
        %746 = vmatpush1.msra.mxu0 0.0
        %747 = vmatprep.subr.mxu0 0.0
        %748 = vmatpush1.msra.mxu0 0.0
        %749 = vmatprep.subr.mxu0 0.0
        %750 = vmatpush1.msra.mxu0 0.0
        %751 = vmatprep.subr.mxu0 0.0
        %752 = vmatpush1.msra.mxu0 0.0
        %753 = vmatprep.subr.mxu0 0.0
        %754 = vmatpush1.msra.mxu0 0.0
        %755 = vmatprep.subr.mxu0 0.0
        %756 = vmatpush1.msra.mxu0 0.0
        %757 = vmatprep.subr.mxu0 0.0
        %758 = vmatpush1.msra.mxu0 0.0
        %759 = vmatprep.mubr.f32.mxu0 0.0
        %760 = vmatmul.mubr.f32.gmra.mrb[0].mxu0 %v693
        %v761 = vpop.f32.mrb[0].mxu0
        %v762 = vadd.f32 0.0, %v761
        %v763 = vpop.f32.mrb[0].mxu0
        %764 = vdwg.mxu0
        %v766 = vsel %vm691, %v611, 0
        %768 = vmatprep.subr.mxu0 0.0
        %769 = vmatpush1.msra.mxu0 %v495
        %770 = vmatprep.subr.mxu0 0.0
        %771 = vmatpush1.msra.mxu0 %v500
        %772 = vmatprep.subr.mxu0 0.0
        %773 = vmatpush1.msra.mxu0 0.0
        %774 = vmatprep.subr.mxu0 0.0
        %775 = vmatpush1.msra.mxu0 0.0
        %776 = vmatprep.subr.mxu0 0.0
        %777 = vmatpush1.msra.mxu0 0.0
        %778 = vmatprep.subr.mxu0 0.0
        %779 = vmatpush1.msra.mxu0 0.0
        %780 = vmatprep.subr.mxu0 0.0
        %781 = vmatpush1.msra.mxu0 0.0
        %782 = vmatprep.subr.mxu0 0.0
        %783 = vmatpush1.msra.mxu0 0.0
        %784 = vmatprep.subr.mxu0 0.0
        %785 = vmatpush1.msra.mxu0 0.0
        %786 = vmatprep.subr.mxu0 0.0
        %787 = vmatpush1.msra.mxu0 0.0
        %788 = vmatprep.subr.mxu0 0.0
        %789 = vmatpush1.msra.mxu0 0.0
        %790 = vmatprep.subr.mxu0 0.0
        %791 = vmatpush1.msra.mxu0 0.0
        %792 = vmatprep.subr.mxu0 0.0
        %793 = vmatpush1.msra.mxu0 0.0
        %794 = vmatprep.subr.mxu0 0.0
        %795 = vmatpush1.msra.mxu0 0.0
        %796 = vmatprep.subr.mxu0 0.0
        %797 = vmatpush1.msra.mxu0 0.0
        %798 = vmatprep.subr.mxu0 0.0
        %799 = vmatpush1.msra.mxu0 0.0
        %800 = vmatprep.subr.mxu0 0.0
        %801 = vmatpush1.msra.mxu0 0.0
        %802 = vmatprep.subr.mxu0 0.0
        %803 = vmatpush1.msra.mxu0 0.0
        %804 = vmatprep.subr.mxu0 0.0
        %805 = vmatpush1.msra.mxu0 0.0
        %806 = vmatprep.subr.mxu0 0.0
        %807 = vmatpush1.msra.mxu0 0.0
        %808 = vmatprep.subr.mxu0 0.0
        %809 = vmatpush1.msra.mxu0 0.0
        %810 = vmatprep.subr.mxu0 0.0
        %811 = vmatpush1.msra.mxu0 0.0
        %812 = vmatprep.subr.mxu0 0.0
        %813 = vmatpush1.msra.mxu0 0.0
        %814 = vmatprep.subr.mxu0 0.0
        %815 = vmatpush1.msra.mxu0 0.0
        %816 = vmatprep.subr.mxu0 0.0
        %817 = vmatpush1.msra.mxu0 0.0
        %818 = vmatprep.subr.mxu0 0.0
        %819 = vmatpush1.msra.mxu0 0.0
        %820 = vmatprep.subr.mxu0 0.0
        %821 = vmatpush1.msra.mxu0 0.0
        %822 = vmatprep.subr.mxu0 0.0
        %823 = vmatpush1.msra.mxu0 0.0
        %824 = vmatprep.subr.mxu0 0.0
        %825 = vmatpush1.msra.mxu0 0.0
        %826 = vmatprep.subr.mxu0 0.0
        %827 = vmatpush1.msra.mxu0 0.0
        %828 = vmatprep.subr.mxu0 0.0
        %829 = vmatpush1.msra.mxu0 0.0
        %830 = vmatprep.subr.mxu0 0.0
        %831 = vmatpush1.msra.mxu0 0.0
        %832 = vmatprep.mubr.f32.mxu0 0.0
        %833 = vmatmul.mubr.f32.gmra.mrb[0].mxu0 %v766
        %v834 = vpop.f32.mrb[0].mxu0
        %v835 = vadd.f32 0.0, %v834
        %v836 = vpop.f32.mrb[0].mxu0
        %837 = vdwg.mxu0
        %v839 = vsel %vm691, %v643, 0
        %841 = vmatprep.subr.mxu0 0.0
        %842 = vmatpush1.msra.mxu0 %v505
        %843 = vmatprep.subr.mxu0 0.0
        %844 = vmatpush1.msra.mxu0 %v510
        %845 = vmatprep.subr.mxu0 0.0
        %846 = vmatpush1.msra.mxu0 0.0
        %847 = vmatprep.subr.mxu0 0.0
        %848 = vmatpush1.msra.mxu0 0.0
        %849 = vmatprep.subr.mxu0 0.0
        %850 = vmatpush1.msra.mxu0 0.0
        %851 = vmatprep.subr.mxu0 0.0
        %852 = vmatpush1.msra.mxu0 0.0
        %853 = vmatprep.subr.mxu0 0.0
        %854 = vmatpush1.msra.mxu0 0.0
        %855 = vmatprep.subr.mxu0 0.0
        %856 = vmatpush1.msra.mxu0 0.0
        %857 = vmatprep.subr.mxu0 0.0
        %858 = vmatpush1.msra.mxu0 0.0
        %859 = vmatprep.subr.mxu0 0.0
        %860 = vmatpush1.msra.mxu0 0.0
        %861 = vmatprep.subr.mxu0 0.0
        %862 = vmatpush1.msra.mxu0 0.0
        %863 = vmatprep.subr.mxu0 0.0
        %864 = vmatpush1.msra.mxu0 0.0
        %865 = vmatprep.subr.mxu0 0.0
        %866 = vmatpush1.msra.mxu0 0.0
        %867 = vmatprep.subr.mxu0 0.0
        %868 = vmatpush1.msra.mxu0 0.0
        %869 = vmatprep.subr.mxu0 0.0
        %870 = vmatpush1.msra.mxu0 0.0
        %871 = vmatprep.subr.mxu0 0.0
        %872 = vmatpush1.msra.mxu0 0.0
        %873 = vmatprep.subr.mxu0 0.0
        %874 = vmatpush1.msra.mxu0 0.0
        %875 = vmatprep.subr.mxu0 0.0
        %876 = vmatpush1.msra.mxu0 0.0
        %877 = vmatprep.subr.mxu0 0.0
        %878 = vmatpush1.msra.mxu0 0.0
        %879 = vmatprep.subr.mxu0 0.0
        %880 = vmatpush1.msra.mxu0 0.0
        %881 = vmatprep.subr.mxu0 0.0
        %882 = vmatpush1.msra.mxu0 0.0
        %883 = vmatprep.subr.mxu0 0.0
        %884 = vmatpush1.msra.mxu0 0.0
        %885 = vmatprep.subr.mxu0 0.0
        %886 = vmatpush1.msra.mxu0 0.0
        %887 = vmatprep.subr.mxu0 0.0
        %888 = vmatpush1.msra.mxu0 0.0
        %889 = vmatprep.subr.mxu0 0.0
        %890 = vmatpush1.msra.mxu0 0.0
        %891 = vmatprep.subr.mxu0 0.0
        %892 = vmatpush1.msra.mxu0 0.0
        %893 = vmatprep.subr.mxu0 0.0
        %894 = vmatpush1.msra.mxu0 0.0
        %895 = vmatprep.subr.mxu0 0.0
        %896 = vmatpush1.msra.mxu0 0.0
        %897 = vmatprep.subr.mxu0 0.0
        %898 = vmatpush1.msra.mxu0 0.0
        %899 = vmatprep.subr.mxu0 0.0
        %900 = vmatpush1.msra.mxu0 0.0
        %901 = vmatprep.subr.mxu0 0.0
        %902 = vmatpush1.msra.mxu0 0.0
        %903 = vmatprep.subr.mxu0 0.0
        %904 = vmatpush1.msra.mxu0 0.0
        %905 = vmatprep.mubr.f32.mxu0 0.0
        %906 = vmatmul.mubr.f32.gmra.mrb[0].mxu0 %v839
        %v907 = vpop.f32.mrb[0].mxu0
        %v908 = vadd.f32 0.0, %v907
        %v909 = vpop.f32.mrb[0].mxu0
        %910 = vdwg.mxu0
        %v912 = vsel %vm691, %v675, 0
        %914 = vmatprep.subr.mxu0 0.0
        %915 = vmatpush1.msra.mxu0 %v515
        %916 = vmatprep.subr.mxu0 0.0
        %917 = vmatpush1.msra.mxu0 %v520
        %918 = vmatprep.subr.mxu0 0.0
        %919 = vmatpush1.msra.mxu0 0.0
        %920 = vmatprep.subr.mxu0 0.0
        %921 = vmatpush1.msra.mxu0 0.0
        %922 = vmatprep.subr.mxu0 0.0
        %923 = vmatpush1.msra.mxu0 0.0
        %924 = vmatprep.subr.mxu0 0.0
        %925 = vmatpush1.msra.mxu0 0.0
        %926 = vmatprep.subr.mxu0 0.0
        %927 = vmatpush1.msra.mxu0 0.0
        %928 = vmatprep.subr.mxu0 0.0
        %929 = vmatpush1.msra.mxu0 0.0
        %930 = vmatprep.subr.mxu0 0.0
        %931 = vmatpush1.msra.mxu0 0.0
        %932 = vmatprep.subr.mxu0 0.0
        %933 = vmatpush1.msra.mxu0 0.0
        %934 = vmatprep.subr.mxu0 0.0
        %935 = vmatpush1.msra.mxu0 0.0
        %936 = vmatprep.subr.mxu0 0.0
        %937 = vmatpush1.msra.mxu0 0.0
        %938 = vmatprep.subr.mxu0 0.0
        %939 = vmatpush1.msra.mxu0 0.0
        %940 = vmatprep.subr.mxu0 0.0
        %941 = vmatpush1.msra.mxu0 0.0
        %942 = vmatprep.subr.mxu0 0.0
        %943 = vmatpush1.msra.mxu0 0.0
        %944 = vmatprep.subr.mxu0 0.0
        %945 = vmatpush1.msra.mxu0 0.0
        %946 = vmatprep.subr.mxu0 0.0
        %947 = vmatpush1.msra.mxu0 0.0
        %948 = vmatprep.subr.mxu0 0.0
        %949 = vmatpush1.msra.mxu0 0.0
        %950 = vmatprep.subr.mxu0 0.0
        %951 = vmatpush1.msra.mxu0 0.0
        %952 = vmatprep.subr.mxu0 0.0
        %953 = vmatpush1.msra.mxu0 0.0
        %954 = vmatprep.subr.mxu0 0.0
        %955 = vmatpush1.msra.mxu0 0.0
        %956 = vmatprep.subr.mxu0 0.0
        %957 = vmatpush1.msra.mxu0 0.0
        %958 = vmatprep.subr.mxu0 0.0
        %959 = vmatpush1.msra.mxu0 0.0
        %960 = vmatprep.subr.mxu0 0.0
        %961 = vmatpush1.msra.mxu0 0.0
        %962 = vmatprep.subr.mxu0 0.0
        %963 = vmatpush1.msra.mxu0 0.0
        %964 = vmatprep.subr.mxu0 0.0
        %965 = vmatpush1.msra.mxu0 0.0
        %966 = vmatprep.subr.mxu0 0.0
        %967 = vmatpush1.msra.mxu0 0.0
        %968 = vmatprep.subr.mxu0 0.0
        %969 = vmatpush1.msra.mxu0 0.0
        %970 = vmatprep.subr.mxu0 0.0
        %971 = vmatpush1.msra.mxu0 0.0
        %972 = vmatprep.subr.mxu0 0.0
        %973 = vmatpush1.msra.mxu0 0.0
        %974 = vmatprep.subr.mxu0 0.0
        %975 = vmatpush1.msra.mxu0 0.0
        %976 = vmatprep.subr.mxu0 0.0
        %977 = vmatpush1.msra.mxu0 0.0
        %978 = vmatprep.mubr.f32.mxu0 0.0
        %979 = vmatmul.mubr.f32.gmra.mrb[0].mxu0 %v912
        %v980 = vpop.f32.mrb[0].mxu0
        %v981 = vadd.f32 0.0, %v980
        %v982 = vpop.f32.mrb[0].mxu0
        %983 = vdwg.mxu0
        %vm984 = vcmask 64512
        %v985 = vsel %vm984, %v762, -inf
        %986 = vmax.xlane.f32.xlu0 %v985
        %v987 = vpop.xlane.xlu0 %986
        %v988 = vsel %vm984, %v835, -inf
        %989 = vmax.xlane.f32.xlu0 %v988
        %v990 = vpop.xlane.xlu0 %989
        %v991 = vsel %vm984, %v908, -inf
        %992 = vmax.xlane.f32.xlu0 %v991
        %v993 = vpop.xlane.xlu0 %992
        %v994 = vsel %vm984, %v981, -inf
        %995 = vmax.xlane.f32.xlu0 %v994
        %v996 = vpop.xlane.xlu0 %995
        %v997 = vsub.f32 %v762, %v987
        %v998 = vsub.f32 %v835, %v990
        %v999 = vsub.f32 %v908, %v993
        %v1000 = vsub.f32 %v981, %v996
        %v1001 = vmul.f32 %v997, 1.442695
        %v1002 = vpow.pop %v1001
        %v1003 = vmul.f32 %v998, 1.442695
        %v1004 = vpow.pop %v1003
        %v1005 = vmul.f32 %v999, 1.442695
        %v1006 = vpow.pop %v1005
        %v1007 = vmul.f32 %v1000, 1.442695
        %v1008 = vpow.pop %v1007
        %v1009 = vsel %vm984, %v1002, 0.0
        %1010 = vadd.xlane.f32.xlu0 %v1009
        %v1011 = vpop.xlane.xlu0 %1010
        %v1012 = vsel %vm984, %v1004, 0.0
        %1013 = vadd.xlane.f32.xlu0 %v1012
        %v1014 = vpop.xlane.xlu0 %1013
        %v1015 = vsel %vm984, %v1006, 0.0
        %1016 = vadd.xlane.f32.xlu0 %v1015
        %v1017 = vpop.xlane.xlu0 %1016
        %v1018 = vsel %vm984, %v1008, 0.0
        %1019 = vadd.xlane.f32.xlu0 %v1018
        %v1020 = vpop.xlane.xlu0 %1019
        %v1021 = vrcp.pop %v1011
        %v1022 = vrcp.pop %v1014
        %v1023 = vrcp.pop %v1017
        %v1024 = vrcp.pop %v1020
        %v1025 = vmul.f32 %v1002, %v1021
        %v1026 = vmul.f32 %v1004, %v1022
        %v1027 = vmul.f32 %v1006, %v1023
        %v1028 = vmul.f32 %v1008, %v1024
        %v1030 = vsel %vm984, %v1025, 0
        %v1033 = vsel %vm984, %v525, 0
        %v1036 = vsel %vm984, %v530, 0
        %1038 = vmatprep.subr.mxu0 0.0
        %1039 = vmatpush1.xpose.msra.mxu0 %v1033
        %1040 = vmatprep.subr.mxu0 0.0
        %1041 = vmatpush1.xpose.msra.mxu0 %v1036
        %1042 = vmatprep.subr.mxu0 0.0
        %1043 = vmatpush1.xpose.msra.mxu0 0.0
        %1044 = vmatprep.subr.mxu0 0.0
        %1045 = vmatpush1.xpose.msra.mxu0 0.0
        %1046 = vmatprep.subr.mxu0 0.0
        %1047 = vmatpush1.xpose.msra.mxu0 0.0
        %1048 = vmatprep.subr.mxu0 0.0
        %1049 = vmatpush1.xpose.msra.mxu0 0.0
        %1050 = vmatprep.subr.mxu0 0.0
        %1051 = vmatpush1.xpose.msra.mxu0 0.0
        %1052 = vmatprep.subr.mxu0 0.0
        %1053 = vmatpush1.xpose.msra.mxu0 0.0
        %1054 = vmatprep.subr.mxu0 0.0
        %1055 = vmatpush1.xpose.msra.mxu0 0.0
        %1056 = vmatprep.subr.mxu0 0.0
        %1057 = vmatpush1.xpose.msra.mxu0 0.0
        %1058 = vmatprep.subr.mxu0 0.0
        %1059 = vmatpush1.xpose.msra.mxu0 0.0
        %1060 = vmatprep.subr.mxu0 0.0
        %1061 = vmatpush1.xpose.msra.mxu0 0.0
        %1062 = vmatprep.subr.mxu0 0.0
        %1063 = vmatpush1.xpose.msra.mxu0 0.0
        %1064 = vmatprep.subr.mxu0 0.0
        %1065 = vmatpush1.xpose.msra.mxu0 0.0
        %1066 = vmatprep.subr.mxu0 0.0
        %1067 = vmatpush1.xpose.msra.mxu0 0.0
        %1068 = vmatprep.subr.mxu0 0.0
        %1069 = vmatpush1.xpose.msra.mxu0 0.0
        %1070 = vmatprep.subr.mxu0 0.0
        %1071 = vmatpush1.xpose.msra.mxu0 0.0
        %1072 = vmatprep.subr.mxu0 0.0
        %1073 = vmatpush1.xpose.msra.mxu0 0.0
        %1074 = vmatprep.subr.mxu0 0.0
        %1075 = vmatpush1.xpose.msra.mxu0 0.0
        %1076 = vmatprep.subr.mxu0 0.0
        %1077 = vmatpush1.xpose.msra.mxu0 0.0
        %1078 = vmatprep.subr.mxu0 0.0
        %1079 = vmatpush1.xpose.msra.mxu0 0.0
        %1080 = vmatprep.subr.mxu0 0.0
        %1081 = vmatpush1.xpose.msra.mxu0 0.0
        %1082 = vmatprep.subr.mxu0 0.0
        %1083 = vmatpush1.xpose.msra.mxu0 0.0
        %1084 = vmatprep.subr.mxu0 0.0
        %1085 = vmatpush1.xpose.msra.mxu0 0.0
        %1086 = vmatprep.subr.mxu0 0.0
        %1087 = vmatpush1.xpose.msra.mxu0 0.0
        %1088 = vmatprep.subr.mxu0 0.0
        %1089 = vmatpush1.xpose.msra.mxu0 0.0
        %1090 = vmatprep.subr.mxu0 0.0
        %1091 = vmatpush1.xpose.msra.mxu0 0.0
        %1092 = vmatprep.subr.mxu0 0.0
        %1093 = vmatpush1.xpose.msra.mxu0 0.0
        %1094 = vmatprep.subr.mxu0 0.0
        %1095 = vmatpush1.xpose.msra.mxu0 0.0
        %1096 = vmatprep.subr.mxu0 0.0
        %1097 = vmatpush1.xpose.msra.mxu0 0.0
        %1098 = vmatprep.subr.mxu0 0.0
        %1099 = vmatpush1.xpose.msra.mxu0 0.0
        %1100 = vmatprep.subr.mxu0 0.0
        %1101 = vmatpush1.xpose.msra.mxu0 0.0
        %1102 = vmatprep.mubr.f32.mxu0 0.0
        %1103 = vmatmul.mubr.f32.gmra.mrb[0].mxu0 %v1030
        %v1104 = vpop.f32.mrb[0].mxu0
        %v1105 = vadd.f32 0.0, %v1104
        %v1106 = vpop.f32.mrb[0].mxu0
        %1107 = vdwg.mxu0
        %v1109 = vsel %vm984, %v1026, 0
        %v1112 = vsel %vm984, %v535, 0
        %v1115 = vsel %vm984, %v540, 0
        %1117 = vmatprep.subr.mxu0 0.0
        %1118 = vmatpush1.xpose.msra.mxu0 %v1112
        %1119 = vmatprep.subr.mxu0 0.0
        %1120 = vmatpush1.xpose.msra.mxu0 %v1115
        %1121 = vmatprep.subr.mxu0 0.0
        %1122 = vmatpush1.xpose.msra.mxu0 0.0
        %1123 = vmatprep.subr.mxu0 0.0
        %1124 = vmatpush1.xpose.msra.mxu0 0.0
        %1125 = vmatprep.subr.mxu0 0.0
        %1126 = vmatpush1.xpose.msra.mxu0 0.0
        %1127 = vmatprep.subr.mxu0 0.0
        %1128 = vmatpush1.xpose.msra.mxu0 0.0
        %1129 = vmatprep.subr.mxu0 0.0
        %1130 = vmatpush1.xpose.msra.mxu0 0.0
        %1131 = vmatprep.subr.mxu0 0.0
        %1132 = vmatpush1.xpose.msra.mxu0 0.0
        %1133 = vmatprep.subr.mxu0 0.0
        %1134 = vmatpush1.xpose.msra.mxu0 0.0
        %1135 = vmatprep.subr.mxu0 0.0
        %1136 = vmatpush1.xpose.msra.mxu0 0.0
        %1137 = vmatprep.subr.mxu0 0.0
        %1138 = vmatpush1.xpose.msra.mxu0 0.0
        %1139 = vmatprep.subr.mxu0 0.0
        %1140 = vmatpush1.xpose.msra.mxu0 0.0
        %1141 = vmatprep.subr.mxu0 0.0
        %1142 = vmatpush1.xpose.msra.mxu0 0.0
        %1143 = vmatprep.subr.mxu0 0.0
        %1144 = vmatpush1.xpose.msra.mxu0 0.0
        %1145 = vmatprep.subr.mxu0 0.0
        %1146 = vmatpush1.xpose.msra.mxu0 0.0
        %1147 = vmatprep.subr.mxu0 0.0
        %1148 = vmatpush1.xpose.msra.mxu0 0.0
        %1149 = vmatprep.subr.mxu0 0.0
        %1150 = vmatpush1.xpose.msra.mxu0 0.0
        %1151 = vmatprep.subr.mxu0 0.0
        %1152 = vmatpush1.xpose.msra.mxu0 0.0
        %1153 = vmatprep.subr.mxu0 0.0
        %1154 = vmatpush1.xpose.msra.mxu0 0.0
        %1155 = vmatprep.subr.mxu0 0.0
        %1156 = vmatpush1.xpose.msra.mxu0 0.0
        %1157 = vmatprep.subr.mxu0 0.0
        %1158 = vmatpush1.xpose.msra.mxu0 0.0
        %1159 = vmatprep.subr.mxu0 0.0
        %1160 = vmatpush1.xpose.msra.mxu0 0.0
        %1161 = vmatprep.subr.mxu0 0.0
        %1162 = vmatpush1.xpose.msra.mxu0 0.0
        %1163 = vmatprep.subr.mxu0 0.0
        %1164 = vmatpush1.xpose.msra.mxu0 0.0
        %1165 = vmatprep.subr.mxu0 0.0
        %1166 = vmatpush1.xpose.msra.mxu0 0.0
        %1167 = vmatprep.subr.mxu0 0.0
        %1168 = vmatpush1.xpose.msra.mxu0 0.0
        %1169 = vmatprep.subr.mxu0 0.0
        %1170 = vmatpush1.xpose.msra.mxu0 0.0
        %1171 = vmatprep.subr.mxu0 0.0
        %1172 = vmatpush1.xpose.msra.mxu0 0.0
        %1173 = vmatprep.subr.mxu0 0.0
        %1174 = vmatpush1.xpose.msra.mxu0 0.0
        %1175 = vmatprep.subr.mxu0 0.0
        %1176 = vmatpush1.xpose.msra.mxu0 0.0
        %1177 = vmatprep.subr.mxu0 0.0
        %1178 = vmatpush1.xpose.msra.mxu0 0.0
        %1179 = vmatprep.subr.mxu0 0.0
        %1180 = vmatpush1.xpose.msra.mxu0 0.0
        %1181 = vmatprep.mubr.f32.mxu0 0.0
        %1182 = vmatmul.mubr.f32.gmra.mrb[0].mxu0 %v1109
        %v1183 = vpop.f32.mrb[0].mxu0
        %v1184 = vadd.f32 0.0, %v1183
        %v1185 = vpop.f32.mrb[0].mxu0
        %1186 = vdwg.mxu0
        %v1188 = vsel %vm984, %v1027, 0
        %v1191 = vsel %vm984, %v545, 0
        %v1194 = vsel %vm984, %v550, 0
        %1196 = vmatprep.subr.mxu0 0.0
        %1197 = vmatpush1.xpose.msra.mxu0 %v1191
        %1198 = vmatprep.subr.mxu0 0.0
        %1199 = vmatpush1.xpose.msra.mxu0 %v1194
        %1200 = vmatprep.subr.mxu0 0.0
        %1201 = vmatpush1.xpose.msra.mxu0 0.0
        %1202 = vmatprep.subr.mxu0 0.0
        %1203 = vmatpush1.xpose.msra.mxu0 0.0
        %1204 = vmatprep.subr.mxu0 0.0
        %1205 = vmatpush1.xpose.msra.mxu0 0.0
        %1206 = vmatprep.subr.mxu0 0.0
        %1207 = vmatpush1.xpose.msra.mxu0 0.0
        %1208 = vmatprep.subr.mxu0 0.0
        %1209 = vmatpush1.xpose.msra.mxu0 0.0
        %1210 = vmatprep.subr.mxu0 0.0
        %1211 = vmatpush1.xpose.msra.mxu0 0.0
        %1212 = vmatprep.subr.mxu0 0.0
        %1213 = vmatpush1.xpose.msra.mxu0 0.0
        %1214 = vmatprep.subr.mxu0 0.0
        %1215 = vmatpush1.xpose.msra.mxu0 0.0
        %1216 = vmatprep.subr.mxu0 0.0
        %1217 = vmatpush1.xpose.msra.mxu0 0.0
        %1218 = vmatprep.subr.mxu0 0.0
        %1219 = vmatpush1.xpose.msra.mxu0 0.0
        %1220 = vmatprep.subr.mxu0 0.0
        %1221 = vmatpush1.xpose.msra.mxu0 0.0
        %1222 = vmatprep.subr.mxu0 0.0
        %1223 = vmatpush1.xpose.msra.mxu0 0.0
        %1224 = vmatprep.subr.mxu0 0.0
        %1225 = vmatpush1.xpose.msra.mxu0 0.0
        %1226 = vmatprep.subr.mxu0 0.0
        %1227 = vmatpush1.xpose.msra.mxu0 0.0
        %1228 = vmatprep.subr.mxu0 0.0
        %1229 = vmatpush1.xpose.msra.mxu0 0.0
        %1230 = vmatprep.subr.mxu0 0.0
        %1231 = vmatpush1.xpose.msra.mxu0 0.0
        %1232 = vmatprep.subr.mxu0 0.0
        %1233 = vmatpush1.xpose.msra.mxu0 0.0
        %1234 = vmatprep.subr.mxu0 0.0
        %1235 = vmatpush1.xpose.msra.mxu0 0.0
        %1236 = vmatprep.subr.mxu0 0.0
        %1237 = vmatpush1.xpose.msra.mxu0 0.0
        %1238 = vmatprep.subr.mxu0 0.0
        %1239 = vmatpush1.xpose.msra.mxu0 0.0
        %1240 = vmatprep.subr.mxu0 0.0
        %1241 = vmatpush1.xpose.msra.mxu0 0.0
        %1242 = vmatprep.subr.mxu0 0.0
        %1243 = vmatpush1.xpose.msra.mxu0 0.0
        %1244 = vmatprep.subr.mxu0 0.0
        %1245 = vmatpush1.xpose.msra.mxu0 0.0
        %1246 = vmatprep.subr.mxu0 0.0
        %1247 = vmatpush1.xpose.msra.mxu0 0.0
        %1248 = vmatprep.subr.mxu0 0.0
        %1249 = vmatpush1.xpose.msra.mxu0 0.0
        %1250 = vmatprep.subr.mxu0 0.0
        %1251 = vmatpush1.xpose.msra.mxu0 0.0
        %1252 = vmatprep.subr.mxu0 0.0
        %1253 = vmatpush1.xpose.msra.mxu0 0.0
        %1254 = vmatprep.subr.mxu0 0.0
        %1255 = vmatpush1.xpose.msra.mxu0 0.0
        %1256 = vmatprep.subr.mxu0 0.0
        %1257 = vmatpush1.xpose.msra.mxu0 0.0
        %1258 = vmatprep.subr.mxu0 0.0
        %1259 = vmatpush1.xpose.msra.mxu0 0.0
        %1260 = vmatprep.mubr.f32.mxu0 0.0
        %1261 = vmatmul.mubr.f32.gmra.mrb[0].mxu0 %v1188
        %v1262 = vpop.f32.mrb[0].mxu0
        %v1263 = vadd.f32 0.0, %v1262
        %v1264 = vpop.f32.mrb[0].mxu0
        %1265 = vdwg.mxu0
        %v1267 = vsel %vm984, %v1028, 0
        %v1270 = vsel %vm984, %v555, 0
        %v1273 = vsel %vm984, %v560, 0
        %1275 = vmatprep.subr.mxu0 0.0
        %1276 = vmatpush1.xpose.msra.mxu0 %v1270
        %1277 = vmatprep.subr.mxu0 0.0
        %1278 = vmatpush1.xpose.msra.mxu0 %v1273
        %1279 = vmatprep.subr.mxu0 0.0
        %1280 = vmatpush1.xpose.msra.mxu0 0.0
        %1281 = vmatprep.subr.mxu0 0.0
        %1282 = vmatpush1.xpose.msra.mxu0 0.0
        %1283 = vmatprep.subr.mxu0 0.0
        %1284 = vmatpush1.xpose.msra.mxu0 0.0
        %1285 = vmatprep.subr.mxu0 0.0
        %1286 = vmatpush1.xpose.msra.mxu0 0.0
        %1287 = vmatprep.subr.mxu0 0.0
        %1288 = vmatpush1.xpose.msra.mxu0 0.0
        %1289 = vmatprep.subr.mxu0 0.0
        %1290 = vmatpush1.xpose.msra.mxu0 0.0
        %1291 = vmatprep.subr.mxu0 0.0
        %1292 = vmatpush1.xpose.msra.mxu0 0.0
        %1293 = vmatprep.subr.mxu0 0.0
        %1294 = vmatpush1.xpose.msra.mxu0 0.0
        %1295 = vmatprep.subr.mxu0 0.0
        %1296 = vmatpush1.xpose.msra.mxu0 0.0
        %1297 = vmatprep.subr.mxu0 0.0
        %1298 = vmatpush1.xpose.msra.mxu0 0.0
        %1299 = vmatprep.subr.mxu0 0.0
        %1300 = vmatpush1.xpose.msra.mxu0 0.0
        %1301 = vmatprep.subr.mxu0 0.0
        %1302 = vmatpush1.xpose.msra.mxu0 0.0
        %1303 = vmatprep.subr.mxu0 0.0
        %1304 = vmatpush1.xpose.msra.mxu0 0.0
        %1305 = vmatprep.subr.mxu0 0.0
        %1306 = vmatpush1.xpose.msra.mxu0 0.0
        %1307 = vmatprep.subr.mxu0 0.0
        %1308 = vmatpush1.xpose.msra.mxu0 0.0
        %1309 = vmatprep.subr.mxu0 0.0
        %1310 = vmatpush1.xpose.msra.mxu0 0.0
        %1311 = vmatprep.subr.mxu0 0.0
        %1312 = vmatpush1.xpose.msra.mxu0 0.0
        %1313 = vmatprep.subr.mxu0 0.0
        %1314 = vmatpush1.xpose.msra.mxu0 0.0
        %1315 = vmatprep.subr.mxu0 0.0
        %1316 = vmatpush1.xpose.msra.mxu0 0.0
        %1317 = vmatprep.subr.mxu0 0.0
        %1318 = vmatpush1.xpose.msra.mxu0 0.0
        %1319 = vmatprep.subr.mxu0 0.0
        %1320 = vmatpush1.xpose.msra.mxu0 0.0
        %1321 = vmatprep.subr.mxu0 0.0
        %1322 = vmatpush1.xpose.msra.mxu0 0.0
        %1323 = vmatprep.subr.mxu0 0.0
        %1324 = vmatpush1.xpose.msra.mxu0 0.0
        %1325 = vmatprep.subr.mxu0 0.0
        %1326 = vmatpush1.xpose.msra.mxu0 0.0
        %1327 = vmatprep.subr.mxu0 0.0
        %1328 = vmatpush1.xpose.msra.mxu0 0.0
        %1329 = vmatprep.subr.mxu0 0.0
        %1330 = vmatpush1.xpose.msra.mxu0 0.0
        %1331 = vmatprep.subr.mxu0 0.0
        %1332 = vmatpush1.xpose.msra.mxu0 0.0
        %1333 = vmatprep.subr.mxu0 0.0
        %1334 = vmatpush1.xpose.msra.mxu0 0.0
        %1335 = vmatprep.subr.mxu0 0.0
        %1336 = vmatpush1.xpose.msra.mxu0 0.0
        %1337 = vmatprep.subr.mxu0 0.0
        %1338 = vmatpush1.xpose.msra.mxu0 0.0
        %1339 = vmatprep.mubr.f32.mxu0 0.0
        %1340 = vmatmul.mubr.f32.gmra.mrb[0].mxu0 %v1267
        %v1341 = vpop.f32.mrb[0].mxu0
        %v1342 = vadd.f32 0.0, %v1341
        %v1343 = vpop.f32.mrb[0].mxu0
        %1344 = vdwg.mxu0
        %v1345 = vld [vmem:[%s4] sm:$0xff]
        %v1346 = vld [vmem:[%s4 + $0x8] sm:$0xff]
        %v1347 = vld [vmem:[%s4 + $0x10] sm:$0xff]
        %v1348 = vld [vmem:[%s4 + $0x18] sm:$0xff]
        %v1349 = vld [vmem:[%s4 + $0x20] sm:$0xff]
        %v1350 = vld [vmem:[%s4 + $0x28] sm:$0xff]
        %v1351 = vld [vmem:[%s4 + $0x30] sm:$0xff]
        %v1352 = vld [vmem:[%s4 + $0x38] sm:$0xff]
        %v1354 = vsel %vm691, %v1105, 0
        %1356 = vmatprep.subr.mxu0 0.0
        %1357 = vmatpush1.msra.mxu0 %v1345
        %1358 = vmatprep.subr.mxu0 0.0
        %1359 = vmatpush1.msra.mxu0 %v1346
        %1360 = vmatprep.subr.mxu0 0.0
        %1361 = vmatpush1.msra.mxu0 0.0
        %1362 = vmatprep.subr.mxu0 0.0
        %1363 = vmatpush1.msra.mxu0 0.0
        %1364 = vmatprep.subr.mxu0 0.0
        %1365 = vmatpush1.msra.mxu0 0.0
        %1366 = vmatprep.subr.mxu0 0.0
        %1367 = vmatpush1.msra.mxu0 0.0
        %1368 = vmatprep.subr.mxu0 0.0
        %1369 = vmatpush1.msra.mxu0 0.0
        %1370 = vmatprep.subr.mxu0 0.0
        %1371 = vmatpush1.msra.mxu0 0.0
        %1372 = vmatprep.subr.mxu0 0.0
        %1373 = vmatpush1.msra.mxu0 0.0
        %1374 = vmatprep.subr.mxu0 0.0
        %1375 = vmatpush1.msra.mxu0 0.0
        %1376 = vmatprep.subr.mxu0 0.0
        %1377 = vmatpush1.msra.mxu0 0.0
        %1378 = vmatprep.subr.mxu0 0.0
        %1379 = vmatpush1.msra.mxu0 0.0
        %1380 = vmatprep.subr.mxu0 0.0
        %1381 = vmatpush1.msra.mxu0 0.0
        %1382 = vmatprep.subr.mxu0 0.0
        %1383 = vmatpush1.msra.mxu0 0.0
        %1384 = vmatprep.subr.mxu0 0.0
        %1385 = vmatpush1.msra.mxu0 0.0
        %1386 = vmatprep.subr.mxu0 0.0
        %1387 = vmatpush1.msra.mxu0 0.0
        %1388 = vmatprep.subr.mxu0 0.0
        %1389 = vmatpush1.msra.mxu0 0.0
        %1390 = vmatprep.subr.mxu0 0.0
        %1391 = vmatpush1.msra.mxu0 0.0
        %1392 = vmatprep.subr.mxu0 0.0
        %1393 = vmatpush1.msra.mxu0 0.0
        %1394 = vmatprep.subr.mxu0 0.0
        %1395 = vmatpush1.msra.mxu0 0.0
        %1396 = vmatprep.subr.mxu0 0.0
        %1397 = vmatpush1.msra.mxu0 0.0
        %1398 = vmatprep.subr.mxu0 0.0
        %1399 = vmatpush1.msra.mxu0 0.0
        %1400 = vmatprep.subr.mxu0 0.0
        %1401 = vmatpush1.msra.mxu0 0.0
        %1402 = vmatprep.subr.mxu0 0.0
        %1403 = vmatpush1.msra.mxu0 0.0
        %1404 = vmatprep.subr.mxu0 0.0
        %1405 = vmatpush1.msra.mxu0 0.0
        %1406 = vmatprep.subr.mxu0 0.0
        %1407 = vmatpush1.msra.mxu0 0.0
        %1408 = vmatprep.subr.mxu0 0.0
        %1409 = vmatpush1.msra.mxu0 0.0
        %1410 = vmatprep.subr.mxu0 0.0
        %1411 = vmatpush1.msra.mxu0 0.0
        %1412 = vmatprep.subr.mxu0 0.0
        %1413 = vmatpush1.msra.mxu0 0.0
        %1414 = vmatprep.subr.mxu0 0.0
        %1415 = vmatpush1.msra.mxu0 0.0
        %1416 = vmatprep.subr.mxu0 0.0
        %1417 = vmatpush1.msra.mxu0 0.0
        %1418 = vmatprep.subr.mxu0 0.0
        %1419 = vmatpush1.msra.mxu0 0.0
        %1420 = vmatprep.mubr.f32.mxu0 0.0
        %1421 = vmatmul.mubr.f32.gmra.mrb[0].mxu0 %v1354
        %v1422 = vpop.f32.mrb[0].mxu0
        %v1423 = vadd.f32 0.0, %v1422
        %v1424 = vpop.f32.mrb[0].mxu0
        %1425 = vdwg.mxu0
        %v1427 = vsel %vm691, %v1184, 0
        %1429 = vmatprep.subr.mxu0 0.0
        %1430 = vmatpush1.msra.mxu0 %v1347
        %1431 = vmatprep.subr.mxu0 0.0
        %1432 = vmatpush1.msra.mxu0 %v1348
        %1433 = vmatprep.subr.mxu0 0.0
        %1434 = vmatpush1.msra.mxu0 0.0
        %1435 = vmatprep.subr.mxu0 0.0
        %1436 = vmatpush1.msra.mxu0 0.0
        %1437 = vmatprep.subr.mxu0 0.0
        %1438 = vmatpush1.msra.mxu0 0.0
        %1439 = vmatprep.subr.mxu0 0.0
        %1440 = vmatpush1.msra.mxu0 0.0
        %1441 = vmatprep.subr.mxu0 0.0
        %1442 = vmatpush1.msra.mxu0 0.0
        %1443 = vmatprep.subr.mxu0 0.0
        %1444 = vmatpush1.msra.mxu0 0.0
        %1445 = vmatprep.subr.mxu0 0.0
        %1446 = vmatpush1.msra.mxu0 0.0
        %1447 = vmatprep.subr.mxu0 0.0
        %1448 = vmatpush1.msra.mxu0 0.0
        %1449 = vmatprep.subr.mxu0 0.0
        %1450 = vmatpush1.msra.mxu0 0.0
        %1451 = vmatprep.subr.mxu0 0.0
        %1452 = vmatpush1.msra.mxu0 0.0
        %1453 = vmatprep.subr.mxu0 0.0
        %1454 = vmatpush1.msra.mxu0 0.0
        %1455 = vmatprep.subr.mxu0 0.0
        %1456 = vmatpush1.msra.mxu0 0.0
        %1457 = vmatprep.subr.mxu0 0.0
        %1458 = vmatpush1.msra.mxu0 0.0
        %1459 = vmatprep.subr.mxu0 0.0
        %1460 = vmatpush1.msra.mxu0 0.0
        %1461 = vmatprep.subr.mxu0 0.0
        %1462 = vmatpush1.msra.mxu0 0.0
        %1463 = vmatprep.subr.mxu0 0.0
        %1464 = vmatpush1.msra.mxu0 0.0
        %1465 = vmatprep.subr.mxu0 0.0
        %1466 = vmatpush1.msra.mxu0 0.0
        %1467 = vmatprep.subr.mxu0 0.0
        %1468 = vmatpush1.msra.mxu0 0.0
        %1469 = vmatprep.subr.mxu0 0.0
        %1470 = vmatpush1.msra.mxu0 0.0
        %1471 = vmatprep.subr.mxu0 0.0
        %1472 = vmatpush1.msra.mxu0 0.0
        %1473 = vmatprep.subr.mxu0 0.0
        %1474 = vmatpush1.msra.mxu0 0.0
        %1475 = vmatprep.subr.mxu0 0.0
        %1476 = vmatpush1.msra.mxu0 0.0
        %1477 = vmatprep.subr.mxu0 0.0
        %1478 = vmatpush1.msra.mxu0 0.0
        %1479 = vmatprep.subr.mxu0 0.0
        %1480 = vmatpush1.msra.mxu0 0.0
        %1481 = vmatprep.subr.mxu0 0.0
        %1482 = vmatpush1.msra.mxu0 0.0
        %1483 = vmatprep.subr.mxu0 0.0
        %1484 = vmatpush1.msra.mxu0 0.0
        %1485 = vmatprep.subr.mxu0 0.0
        %1486 = vmatpush1.msra.mxu0 0.0
        %1487 = vmatprep.subr.mxu0 0.0
        %1488 = vmatpush1.msra.mxu0 0.0
        %1489 = vmatprep.subr.mxu0 0.0
        %1490 = vmatpush1.msra.mxu0 0.0
        %1491 = vmatprep.subr.mxu0 0.0
        %1492 = vmatpush1.msra.mxu0 0.0
        %1493 = vmatprep.mubr.f32.mxu0 0.0
        %1494 = vmatmul.mubr.f32.gmra.mrb[0].mxu0 %v1427
        %v1495 = vpop.f32.mrb[0].mxu0
        %v1496 = vadd.f32 0.0, %v1495
        %v1497 = vpop.f32.mrb[0].mxu0
        %1498 = vdwg.mxu0
        %v1500 = vsel %vm691, %v1263, 0
        %1502 = vmatprep.subr.mxu0 0.0
        %1503 = vmatpush1.msra.mxu0 %v1349
        %1504 = vmatprep.subr.mxu0 0.0
        %1505 = vmatpush1.msra.mxu0 %v1350
        %1506 = vmatprep.subr.mxu0 0.0
        %1507 = vmatpush1.msra.mxu0 0.0
        %1508 = vmatprep.subr.mxu0 0.0
        %1509 = vmatpush1.msra.mxu0 0.0
        %1510 = vmatprep.subr.mxu0 0.0
        %1511 = vmatpush1.msra.mxu0 0.0
        %1512 = vmatprep.subr.mxu0 0.0
        %1513 = vmatpush1.msra.mxu0 0.0
        %1514 = vmatprep.subr.mxu0 0.0
        %1515 = vmatpush1.msra.mxu0 0.0
        %1516 = vmatprep.subr.mxu0 0.0
        %1517 = vmatpush1.msra.mxu0 0.0
        %1518 = vmatprep.subr.mxu0 0.0
        %1519 = vmatpush1.msra.mxu0 0.0
        %1520 = vmatprep.subr.mxu0 0.0
        %1521 = vmatpush1.msra.mxu0 0.0
        %1522 = vmatprep.subr.mxu0 0.0
        %1523 = vmatpush1.msra.mxu0 0.0
        %1524 = vmatprep.subr.mxu0 0.0
        %1525 = vmatpush1.msra.mxu0 0.0
        %1526 = vmatprep.subr.mxu0 0.0
        %1527 = vmatpush1.msra.mxu0 0.0
        %1528 = vmatprep.subr.mxu0 0.0
        %1529 = vmatpush1.msra.mxu0 0.0
        %1530 = vmatprep.subr.mxu0 0.0
        %1531 = vmatpush1.msra.mxu0 0.0
        %1532 = vmatprep.subr.mxu0 0.0
        %1533 = vmatpush1.msra.mxu0 0.0
        %1534 = vmatprep.subr.mxu0 0.0
        %1535 = vmatpush1.msra.mxu0 0.0
        %1536 = vmatprep.subr.mxu0 0.0
        %1537 = vmatpush1.msra.mxu0 0.0
        %1538 = vmatprep.subr.mxu0 0.0
        %1539 = vmatpush1.msra.mxu0 0.0
        %1540 = vmatprep.subr.mxu0 0.0
        %1541 = vmatpush1.msra.mxu0 0.0
        %1542 = vmatprep.subr.mxu0 0.0
        %1543 = vmatpush1.msra.mxu0 0.0
        %1544 = vmatprep.subr.mxu0 0.0
        %1545 = vmatpush1.msra.mxu0 0.0
        %1546 = vmatprep.subr.mxu0 0.0
        %1547 = vmatpush1.msra.mxu0 0.0
        %1548 = vmatprep.subr.mxu0 0.0
        %1549 = vmatpush1.msra.mxu0 0.0
        %1550 = vmatprep.subr.mxu0 0.0
        %1551 = vmatpush1.msra.mxu0 0.0
        %1552 = vmatprep.subr.mxu0 0.0
        %1553 = vmatpush1.msra.mxu0 0.0
        %1554 = vmatprep.subr.mxu0 0.0
        %1555 = vmatpush1.msra.mxu0 0.0
        %1556 = vmatprep.subr.mxu0 0.0
        %1557 = vmatpush1.msra.mxu0 0.0
        %1558 = vmatprep.subr.mxu0 0.0
        %1559 = vmatpush1.msra.mxu0 0.0
        %1560 = vmatprep.subr.mxu0 0.0
        %1561 = vmatpush1.msra.mxu0 0.0
        %1562 = vmatprep.subr.mxu0 0.0
        %1563 = vmatpush1.msra.mxu0 0.0
        %1564 = vmatprep.subr.mxu0 0.0
        %1565 = vmatpush1.msra.mxu0 0.0
        %1566 = vmatprep.mubr.f32.mxu0 0.0
        %1567 = vmatmul.mubr.f32.gmra.mrb[0].mxu0 %v1500
        %v1568 = vpop.f32.mrb[0].mxu0
        %v1569 = vadd.f32 0.0, %v1568
        %v1570 = vpop.f32.mrb[0].mxu0
        %1571 = vdwg.mxu0
        %v1573 = vsel %vm691, %v1342, 0
        %1575 = vmatprep.subr.mxu0 0.0
        %1576 = vmatpush1.msra.mxu0 %v1351
        %1577 = vmatprep.subr.mxu0 0.0
        %1578 = vmatpush1.msra.mxu0 %v1352
        %1579 = vmatprep.subr.mxu0 0.0
        %1580 = vmatpush1.msra.mxu0 0.0
        %1581 = vmatprep.subr.mxu0 0.0
        %1582 = vmatpush1.msra.mxu0 0.0
        %1583 = vmatprep.subr.mxu0 0.0
        %1584 = vmatpush1.msra.mxu0 0.0
        %1585 = vmatprep.subr.mxu0 0.0
        %1586 = vmatpush1.msra.mxu0 0.0
        %1587 = vmatprep.subr.mxu0 0.0
        %1588 = vmatpush1.msra.mxu0 0.0
        %1589 = vmatprep.subr.mxu0 0.0
        %1590 = vmatpush1.msra.mxu0 0.0
        %1591 = vmatprep.subr.mxu0 0.0
        %1592 = vmatpush1.msra.mxu0 0.0
        %1593 = vmatprep.subr.mxu0 0.0
        %1594 = vmatpush1.msra.mxu0 0.0
        %1595 = vmatprep.subr.mxu0 0.0
        %1596 = vmatpush1.msra.mxu0 0.0
        %1597 = vmatprep.subr.mxu0 0.0
        %1598 = vmatpush1.msra.mxu0 0.0
        %1599 = vmatprep.subr.mxu0 0.0
        %1600 = vmatpush1.msra.mxu0 0.0
        %1601 = vmatprep.subr.mxu0 0.0
        %1602 = vmatpush1.msra.mxu0 0.0
        %1603 = vmatprep.subr.mxu0 0.0
        %1604 = vmatpush1.msra.mxu0 0.0
        %1605 = vmatprep.subr.mxu0 0.0
        %1606 = vmatpush1.msra.mxu0 0.0
        %1607 = vmatprep.subr.mxu0 0.0
        %1608 = vmatpush1.msra.mxu0 0.0
        %1609 = vmatprep.subr.mxu0 0.0
        %1610 = vmatpush1.msra.mxu0 0.0
        %1611 = vmatprep.subr.mxu0 0.0
        %1612 = vmatpush1.msra.mxu0 0.0
        %1613 = vmatprep.subr.mxu0 0.0
        %1614 = vmatpush1.msra.mxu0 0.0
        %1615 = vmatprep.subr.mxu0 0.0
        %1616 = vmatpush1.msra.mxu0 0.0
        %1617 = vmatprep.subr.mxu0 0.0
        %1618 = vmatpush1.msra.mxu0 0.0
        %1619 = vmatprep.subr.mxu0 0.0
        %1620 = vmatpush1.msra.mxu0 0.0
        %1621 = vmatprep.subr.mxu0 0.0
        %1622 = vmatpush1.msra.mxu0 0.0
        %1623 = vmatprep.subr.mxu0 0.0
        %1624 = vmatpush1.msra.mxu0 0.0
        %1625 = vmatprep.subr.mxu0 0.0
        %1626 = vmatpush1.msra.mxu0 0.0
        %1627 = vmatprep.subr.mxu0 0.0
        %1628 = vmatpush1.msra.mxu0 0.0
        %1629 = vmatprep.subr.mxu0 0.0
        %1630 = vmatpush1.msra.mxu0 0.0
        %1631 = vmatprep.subr.mxu0 0.0
        %1632 = vmatpush1.msra.mxu0 0.0
        %1633 = vmatprep.subr.mxu0 0.0
        %1634 = vmatpush1.msra.mxu0 0.0
        %1635 = vmatprep.subr.mxu0 0.0
        %1636 = vmatpush1.msra.mxu0 0.0
        %1637 = vmatprep.subr.mxu0 0.0
        %1638 = vmatpush1.msra.mxu0 0.0
        %1639 = vmatprep.mubr.f32.mxu0 0.0
        %1640 = vmatmul.mubr.f32.gmra.mrb[0].mxu0 %v1573
        %v1641 = vpop.f32.mrb[0].mxu0
        %v1642 = vadd.f32 0.0, %v1641
        %v1643 = vpop.f32.mrb[0].mxu0
        %1644 = vdwg.mxu0
        %v1645 = vsel %vm248, %v1423, 0.0
        %v1646 = vsel %vm248, %v1496, 0.0
        %v1647 = vadd.f32 %v1645, %v1646
        %v1648 = vsel %vm248, %v1569, 0.0
        %v1649 = vadd.f32 %v1647, %v1648
        %v1650 = vsel %vm248, %v1642, 0.0
        %v1651 = vadd.f32 %v1649, %v1650
        %v1652 = vld [vmem:[%s5] sm:$0x1]
        %v1654 = vlaneseq
        %v1655 = vshrl.u32 %v1654, 7
        %v1656 = vsub.s32 0, %v1655
        %v1657 = vrot.slane %v1652, %v1656
        %v1659 = vadd.f32 %v1651, %v1657
        %1660 = vst.msk [vmem:[%s242] sm:$0xff] %vm248, %v1659
        %s1661 = sand.u32 %s159, 1
        %s1662 = scalar_lea.sflag [#allocation3], %s1661
        %s1663 = sand.u32 %s159, 1
        %s1664 = smul.addr %s1663, 8
        %s1665 = scalar_lea.vmem [#allocation2], %s1664
        // Predicated region
        $region45: #{tpu_custom_call.1} parent=43 // pred_check
          %p1666 = pneg %p169
        $region46: #{tpu_custom_call.1} parent=43 // pred_check_branch
          %1668 = sbr.rel (%p1666) target = $region48
        $region47: #{tpu_custom_call.1} parent=43 // pred_region
          %s1670 = ssub.s32 128, 128
          %1671 = vsyncadd %s1662, %s1670
          %s1672 = smul.addr %s20, 128
          %s1673 = scalar_lea.hbm %s6, %s1672
          %s1675 = sshll.u32 %s1665, 4
          %s1676 = int_to_ptr.vmem [resolvable:$true] %s1675
          %1678 = dma.vmem_to_hbm [thread:$0]  %s1676, 128, %s1673, %s1662
        $region48: #{tpu_custom_call.1} parent=43 // pred_fallthru
          _
      $region44: #{tpu_custom_call.1} parent=5 // pred_fallthru
        _
      %p1679 = scmp.le.s32.totalorder 2, %s15
      // Predicated region
      $region49: #{tpu_custom_call.1} parent=5 // pred_check
        %p1680 = pneg %p1679
      $region50: #{tpu_custom_call.1} parent=5 // pred_check_branch
        %1682 = sbr.rel (%p1680) target = $region52
      $region51: #{tpu_custom_call.1} parent=5 // pred_region
        %s1683 = ssub.s32 %s15, 2
        // Predicated region
        $region53: #{tpu_custom_call.1} parent=51 // pred_check
          %p1684 = pneg %p175
        $region54: #{tpu_custom_call.1} parent=51 // pred_check_branch
          %1686 = sbr.rel (%p1684) target = $region56
        $region55: #{tpu_custom_call.1} parent=51 // pred_region
          %s1687 = sand.u32 %s160, 1
          %s1688 = scalar_lea.sflag [#allocation3], %s1687
          %s1689 = sand.u32 %s160, 1
          %s1690 = smul.addr %s1689, 8
          %s1691 = scalar_lea.vmem [#allocation2], %s1690
          %1692 = dma.done %s1688, 128
        $region56: #{tpu_custom_call.1} parent=51 // pred_fallthru
          _
      $region52: #{tpu_custom_call.1} parent=5 // pred_fallthru
        _
    $region6: #{tpu_custom_call.1} parent=1 // loop_footer
      %s19 = sadd.s32 1, %s15
    $region7: #{tpu_custom_call.1} parent=1 // loop_footer_branch
      %14 = sbr.rel target = $region3
    $region8: #{tpu_custom_call.1} parent=1 // loop_exit
      _
    %1693 = vsyncpa [#allocation3], 1
    %s1694 = scalar_lea.sflag [#allocation3], 1
    %1695 = vsyncpa %s1694, 1

</llo_original>
